<compile_context>
chip_gen: v7x
topology: tpu7x:2x2x1
jax: 0.10.0
libtpu: 0.0.40
codegen_flags: <defaults>
</compile_context>

<pallas_src>
import math

import numpy as np
import jax
import jax.numpy as jnp
from jax import lax
from jax.experimental import pallas as pl
from jax.experimental.pallas import tpu as pltpu

# ----------------------- small BonzConfig-consistent sizes -----------------------
SEQ_LEN   = 8                    # config.seq_len
WORD_DIM  = 32                   # config.word_dim
EMB_DIM   = 32                   # config.emb_dim (== word_dim -> no `scale` Linear)
K_DIM     = 4                    # config.k_dim   (Linformer projection length)
NUM_HEAD  = 4                    # config.num_head
HEAD_DIM  = EMB_DIM // NUM_HEAD  # 8
FF_MUL    = 2
GROUP_ATT = 4
GROUP_FF  = 4
NUM_LAYER = 2
VOCAB     = 64                   # config.vocab_size
VOCAB_PAD = 128                  # lane-dense logits store; sliced back to VOCAB in the wrapper
EPS       = 1e-12
BATCH     = 2
FF_DIM    = EMB_DIM * FF_MUL     # 64 (GLU: w1 produces 2x this)
HK        = NUM_HEAD * K_DIM     # 16
BN        = BATCH * SEQ_LEN      # 16
BK        = BATCH * K_DIM        # 8
BHK       = BATCH * HK           # 32  (rows ordered (head, batch, key))
INV_SQRT2 = 1.0 / math.sqrt(2.0)

assert EMB_DIM % K_DIM == 0 and HEAD_DIM % K_DIM == 0
assert HEAD_DIM // K_DIM == 2    # load-bearing for the two-term key-scramble decomposition


# ===================== packed-slab layout (row offsets, 8-sublane aligned) =====================

def _layout(entries):
    offs, row = {}, 0
    for name, r in entries:
        offs[name] = row
        row += ((r + 7) // 8) * 8
    return offs, row


_E32 = ([("tok", VOCAB), ("pos", BN), ("lng", 1), ("lnb", 1), ("pkt", BK),
         ("sel0", BHK), ("sel1", BHK), ("e0", BK), ("e1", BK),
         ("bmask", BHK), ("hmask", BHK), ("seg", BHK), ("bias", BN)]
        + [("vmask%d" % l, BHK) for l in range(NUM_LAYER)]
        + [("w2_%d" % l, 2 * FF_DIM) for l in range(NUM_LAYER)]
        + [("b2_%d" % l, 1) for l in range(NUM_LAYER)])
OFF32, ROWS32 = _layout(_E32)

_E128 = ([("wqk_%d" % l, EMB_DIM) for l in range(NUM_LAYER)]
         + [("w1_%d" % l, EMB_DIM) for l in range(NUM_LAYER)]
         + [("b1_%d" % l, 1) for l in range(NUM_LAYER)]
         + [("lmw", EMB_DIM), ("lmb", 1)])
OFF128, ROWS128 = _layout(_E128)


# ===================== constant matrices for the batched block-diagonal attention ==============
#
# Row index r of the key/value axis is ordered (h, b, k):  r = h*(B*K) + b*K + k.
#   K_bd[r, c] (c in head h's feature slice, c = 8h + 4t + s)  = kv_b[s, 8k + 2h + t] / sqrt(hd)
#   V_bd[r, c]                                                 = alpha_att * kv_b[k, c]
# dots = q @ K_bd^T + bias (bias = -1e9 for cross-batch columns), softmax segmented per head via
# `seg` (head-only: cross-batch exps underflow to exactly 0, so head sums stay correct), then
# ctx = probs @ V_bd gives the concatenated multi-head output already in feature order.

def _attention_constants():
    r = np.arange(BHK)
    h = r // BK
    b = (r // K_DIM) % BATCH
    k = r % K_DIM
    c = np.arange(EMB_DIM)
    src0 = k * (EMB_DIM // K_DIM) + h * (HEAD_DIM // K_DIM)                      # kv source column
    sel0 = (c[None, :] == src0[:, None]).astype(np.float32)                      # (BHK, D)
    sel1 = (c[None, :] == (src0 + 1)[:, None]).astype(np.float32)                # (BHK, D)
    s_col = (c % HEAD_DIM) % K_DIM
    t_col = (c % HEAD_DIM) // K_DIM
    scale = 1.0 / math.sqrt(HEAD_DIM)
    e0 = ((np.arange(K_DIM)[:, None] == s_col[None, :]) & (t_col == 0)[None, :]).astype(np.float32)
    e1 = ((np.arange(K_DIM)[:, None] == s_col[None, :]) & (t_col == 1)[None, :]).astype(np.float32)
    e0 = np.tile(scale * e0, (BATCH, 1))                                         # (BK, D), 1/sqrt(hd) folded
    e1 = np.tile(scale * e1, (BATCH, 1))                                         # (BK, D)
    bmask = (b[:, None] == (np.arange(BK) // K_DIM)[None, :]).astype(np.float32) # (BHK, BK)
    hmask = ((c // HEAD_DIM)[None, :] == h[:, None]).astype(np.float32)          # (BHK, D)
    seg = (h[:, None] == h[None, :]).astype(np.float32)                          # (BHK, BHK)
    bias = np.where((np.arange(BN) // SEQ_LEN)[:, None] == b[None, :],
                    0.0, -1e9).astype(np.float32)                                # (BN, BHK)
    return sel0, sel1, e0, e1, bmask, hmask, seg, bias


# ================================ the fused Pallas kernel =================================

def _fused_forward_kernel(ids_ref, s32_ref, s128_ref, out_ref):
    f32 = jnp.float32

    def mm(a, b):
        return jnp.dot(a, b, preferred_element_type=f32)

    def mm_nt(a, b):   # a @ b.T without materialising a transpose
        return lax.dot_general(a, b, (((1,), (1,)), ((), ())), preferred_element_type=f32)

    def g32(name, rows, cols=EMB_DIM):                 # static view into the 32-lane slab
        o = OFF32[name]
        return s32_ref[o:o + rows, 0:cols]

    def g128(name, rows, cols=VOCAB_PAD):              # static view into the 128-lane slab
        o = OFF128[name]
        return s128_ref[o:o + rows, 0:cols]

    # ---- BonzEmbedding: one-hot token lookup (MXU) + positional add, then LayerNorm ----
    onehot = (lax.broadcasted_iota(jnp.int32, (BN, VOCAB), 1) == ids_ref[...]).astype(f32)
    x = mm(onehot, g32("tok", VOCAB)) + g32("pos", BN)               # (BN, D)
    mean = jnp.mean(x, axis=-1, keepdims=True)
    var = jnp.mean((x - mean) ** 2, axis=-1, keepdims=True)          # biased variance (torch LN)
    x = (x - mean) * lax.rsqrt(var + EPS)
    x = x * g32("lng", 1) + g32("lnb", 1)

    for l in range(NUM_LAYER):                                       # static unroll, 2 layers
        # -------- BonzSelfAttention, all batches & heads in one shot --------
        qk = mm(x, g128("wqk_%d" % l, EMB_DIM, cols=2 * EMB_DIM))    # (BN, 2D) fused Q|K proj
        q_all = qk[:, :EMB_DIM]
        kpre = qk[:, EMB_DIM:]
        kv = mm(g32("pkt", BK, cols=BN), kpre)                       # (B*K, D) values (KEY conv!)
        # scrambled keys assembled as one block-diagonal (H*B*K, D) operand
        bm = g32("bmask", BHK, cols=BK)
        t0 = mm_nt(g32("sel0", BHK), kv) * bm
        t1 = mm_nt(g32("sel1", BHK), kv) * bm
        k_bd = (mm(t0, g32("e0", BK)) + mm(t1, g32("e1", BK))) * g32("hmask", BHK)
        dots = mm_nt(q_all, k_bd) + g32("bias", BN, cols=BHK)        # scale folded in e0/e1
        dots = dots - jnp.max(dots, axis=-1, keepdims=True)          # softmax-invariant row max
        p = jnp.exp(dots)                                            # cross-batch entries -> 0.0
        probs = p / mm(p, g32("seg", BHK, cols=BHK))                 # exact per-(batch,head) softmax
        v_bd = jnp.tile(kv, (NUM_HEAD, 1)) * g32("vmask%d" % l, BHK) # ReZero alpha_att folded in
        x = x + mm(probs, v_bd)                                      # (no output Linear, as in ref)

        # -------- BonzFeedForward (GLU): one 128-lane matmul + lane roll --------
        y = mm(x, g128("w1_%d" % l, EMB_DIM)) + g128("b1_%d" % l, 1)         # (BN, 2*FF)
        gelu = 0.5 * y * (1.0 + lax.erf(y * INV_SQRT2))                      # exact GELU
        z = gelu * pltpu.roll(y, shift=FF_DIM, axis=1)                       # lanes[:FF]=GELU(g)*v
        x = x + mm(z, g32("w2_%d" % l, 2 * FF_DIM)) + g32("b2_%d" % l, 1)    # alpha_ff folded in

    # ---- BonzLMHead: lane-dense (BN, 128) store (vocab padded with zero columns) ----
    out_ref[...] = mm(x, g128("lmw", EMB_DIM)) + g128("lmb", 1)


# ================================ model wrapper (glue) =================================

def bonz_lm_forward(params, input_ids):
    """BonzLM.forward(input_ids, positional_ids=None, labels=None) -> logits."""
    B, N = input_ids.shape
    ids = input_ids.reshape(B * N, 1).astype(jnp.int32)
    vmem = pl.BlockSpec(memory_space=pltpu.MemorySpace.VMEM)
    logits_pad = pl.pallas_call(
        _fused_forward_kernel,
        out_shape=jax.ShapeDtypeStruct((B * N, VOCAB_PAD), jnp.float32),
        in_specs=[vmem, vmem, vmem],
        out_specs=vmem,
    )(ids, params["slab32"], params["slab128"])
    return logits_pad[:, :VOCAB].reshape(B, N, VOCAB)


# ================================ deterministic params =================================

def _block_diag_dense(key, in_dim, out_dim, groups, scale):
    """Dense (in_dim, out_dim) matrix equivalent to a grouped kernel-size-1 Conv1d."""
    in_g, out_g = in_dim // groups, out_dim // groups
    blocks = np.asarray(jax.random.uniform(key, (groups, in_g, out_g), jnp.float32, -scale, scale))
    dense = np.zeros((in_dim, out_dim), np.float32)
    for g in range(groups):
        dense[g * in_g:(g + 1) * in_g, g * out_g:(g + 1) * out_g] = blocks[g]
    return dense


def init_params(key):
    keys = jax.random.split(key, 6 + 6 * NUM_LAYER)
    it = iter(keys)
    unif = lambda k, shape, s: np.asarray(jax.random.uniform(k, shape, jnp.float32, -s, s))
    std = 1.0 / math.sqrt(EMB_DIM)

    tok_emb = unif(next(it), (VOCAB, WORD_DIM), 0.05)
    pos_emb = unif(next(it), (SEQ_LEN, WORD_DIM), 0.05)
    # shared Linformer projection K_shared (one_project=True), stored pre-transposed (K, N)
    pkt = unif(next(it), (K_DIM, SEQ_LEN), 1.0 / math.sqrt(K_DIM))
    lm_w = unif(next(it), (EMB_DIM, VOCAB), std)
    lm_b = unif(next(it), (1, VOCAB), 0.05)

    sel0, sel1, e0, e1, bmask, hmask, seg, bias = _attention_constants()

    pkt_b = np.zeros((BK, BN), np.float32)                           # batch-block-diag project_k^T
    for b in range(BATCH):
        pkt_b[b * K_DIM:(b + 1) * K_DIM, b * SEQ_LEN:(b + 1) * SEQ_LEN] = pkt

    t32 = {
        "tok": tok_emb,
        "pos": np.tile(pos_emb, (BATCH, 1)),                         # pre-tiled positional table
        "lng": np.ones((1, EMB_DIM), np.float32),                    # LayerNorm weight
        "lnb": np.zeros((1, EMB_DIM), np.float32),                   # LayerNorm bias
        "pkt": pkt_b,
        "sel0": sel0, "sel1": sel1, "e0": e0, "e1": e1,
        "bmask": bmask, "hmask": hmask, "seg": seg, "bias": bias,
    }
    t128 = {
        "lmw": np.concatenate([lm_w, np.zeros((EMB_DIM, VOCAB_PAD - VOCAB), np.float32)], axis=1),
        "lmb": np.concatenate([lm_b, np.zeros((1, VOCAB_PAD - VOCAB), np.float32)], axis=1),
    }

    # NOTE: BonzSelfAttention also defines `self.value` and `self.output`, but the reference
    # forward never uses them, so no parameters are created for them here.
    for l in range(NUM_LAYER):
        wq = _block_diag_dense(next(it), EMB_DIM, EMB_DIM, GROUP_ATT, std)
        wk = _block_diag_dense(next(it), EMB_DIM, EMB_DIM, GROUP_ATT, std)
        w1 = _block_diag_dense(next(it), EMB_DIM, 2 * FF_DIM, GROUP_FF, std)   # GLU: gate|value cols
        b1 = unif(next(it), (1, 2 * FF_DIM), 0.05)
        w2 = _block_diag_dense(next(it), FF_DIM, EMB_DIM, GROUP_FF, std)
        b2 = unif(next(it), (1, EMB_DIM), 0.05)
        # ReZero alphas are 0 at torch init (layers would be identity); use small nonzero values
        # so the compute path is exercised, and fold them into constants/weights.
        a_att = 0.5 / (l + 1)
        a_ff = 0.25 / (l + 1)
        t32["vmask%d" % l] = (a_att * hmask).astype(np.float32)
        t32["w2_%d" % l] = np.concatenate([a_ff * w2, np.zeros((FF_DIM, EMB_DIM), np.float32)],
                                          axis=0)                    # zero rows kill the roll garbage
        t32["b2_%d" % l] = (a_ff * b2).astype(np.float32)
        t128["wqk_%d" % l] = np.concatenate([wq, wk], axis=1)         # fused Q|K (32, 64)
        t128["w1_%d" % l] = w1
        t128["b1_%d" % l] = b1

    def pack(offsets, rows, width, tensors):
        slab = np.zeros((rows, width), np.float32)
        for name, arr in tensors.items():
            o = offsets[name]
            r, c = arr.shape
            slab[o:o + r, :c] = arr
        return jnp.asarray(slab)

    return {"slab32": pack(OFF32, ROWS32, EMB_DIM, t32),
            "slab128": pack(OFF128, ROWS128, VOCAB_PAD, t128)}


# ==================================== main ====================================

if __name__ == "__main__":
    root = jax.random.PRNGKey(0)
    params = init_params(root)
    input_ids = jax.random.randint(jax.random.fold_in(root, 123),
                                   (BATCH, SEQ_LEN), 1, VOCAB, dtype=jnp.int32)

    logits = jax.jit(bonz_lm_forward)(params, input_ids)
    jax.block_until_ready(logits)

    assert logits.shape == (BATCH, SEQ_LEN, VOCAB), logits.shape
    assert bool(jnp.all(jnp.isfinite(logits)))
    print("KERNEL_OK")
</pallas_src>

<mosaic_0001>
module attributes {stable_mosaic.version = 11 : i64} {
  func.func @_fused_forward_kernel(%arg0: memref<16x1xi32, #tpu.memory_space<vmem>>, %arg1: memref<632x32xf32, #tpu.memory_space<vmem>>, %arg2: memref<184x128xf32, #tpu.memory_space<vmem>>, %arg3: memref<16x128xf32, #tpu.memory_space<vmem>>) attributes {dimension_semantics = [], scalar_prefetch = 0 : i64, scratch_operands = 0 : i64, tpu.core_type = #tpu.core_type<tc>} {
    %0 = tpu.iota {dimensions = array<i32: 1>} : vector<16x64xi32>
    %c0 = arith.constant 0 : index
    %c0_0 = arith.constant 0 : index
    %1 = vector.load %arg0[%c0, %c0_0] : memref<16x1xi32, #tpu.memory_space<vmem>>, vector<16x1xi32>
    %2 = vector.broadcast %1 : vector<16x1xi32> to vector<16x64xi32>
    %3 = arith.cmpi eq, %0, %2 : vector<16x64xi32>
    %4 = arith.extui %3 : vector<16x64xi1> to vector<16x64xi32>
    %5 = arith.sitofp %4 : vector<16x64xi32> to vector<16x64xf32>
    %c0_1 = arith.constant 0 : index
    %c0_2 = arith.constant 0 : index
    %6 = vector.load %arg1[%c0_1, %c0_2] : memref<632x32xf32, #tpu.memory_space<vmem>>, vector<64x32xf32>
    %cst = arith.constant dense<0.000000e+00> : vector<16x32xf32>
    %7 = tpu.matmul %5, %6, %cst {dimension_numbers = #tpu.dot_dimension_numbers<[1], [0], [0], [1], [0, 0, 1, 1], [], []>} : vector<16x64xf32>, vector<64x32xf32>, vector<16x32xf32> -> vector<16x32xf32>
    %c64 = arith.constant 64 : index
    %c0_3 = arith.constant 0 : index
    %8 = vector.load %arg1[%c64, %c0_3] : memref<632x32xf32, #tpu.memory_space<vmem>>, vector<16x32xf32>
    %9 = arith.addf %7, %8 : vector<16x32xf32>
    %cst_4 = arith.constant dense<0.000000e+00> : vector<16xf32>
    %10 = vector.multi_reduction <add>, %9, %cst_4 [1] : vector<16x32xf32> to vector<16xf32>
    %11 = vector.shape_cast %10 : vector<16xf32> to vector<16x1xf32>
    %cst_5 = arith.constant 3.200000e+01 : f32
    %12 = vector.broadcast %cst_5 : f32 to vector<16x1xf32>
    %13 = arith.divf %11, %12 : vector<16x1xf32>
    %14 = vector.broadcast %13 : vector<16x1xf32> to vector<16x32xf32>
    %15 = arith.subf %9, %14 : vector<16x32xf32>
    %16 = arith.mulf %15, %15 : vector<16x32xf32>
    %cst_6 = arith.constant dense<0.000000e+00> : vector<16xf32>
    %17 = vector.multi_reduction <add>, %16, %cst_6 [1] : vector<16x32xf32> to vector<16xf32>
    %18 = vector.shape_cast %17 : vector<16xf32> to vector<16x1xf32>
    %cst_7 = arith.constant 3.200000e+01 : f32
    %19 = vector.broadcast %cst_7 : f32 to vector<16x1xf32>
    %20 = arith.divf %18, %19 : vector<16x1xf32>
    %21 = vector.broadcast %13 : vector<16x1xf32> to vector<16x32xf32>
    %22 = arith.subf %9, %21 : vector<16x32xf32>
    %cst_8 = arith.constant 9.99999996E-13 : f32
    %23 = vector.broadcast %cst_8 : f32 to vector<16x1xf32>
    %24 = arith.addf %20, %23 : vector<16x1xf32>
    %25 = math.rsqrt %24 : vector<16x1xf32>
    %26 = vector.broadcast %25 : vector<16x1xf32> to vector<16x32xf32>
    %27 = arith.mulf %22, %26 : vector<16x32xf32>
    %c80 = arith.constant 80 : index
    %c0_9 = arith.constant 0 : index
    %28 = vector.load %arg1[%c80, %c0_9] : memref<632x32xf32, #tpu.memory_space<vmem>>, vector<1x32xf32>
    %29 = vector.broadcast %28 : vector<1x32xf32> to vector<16x32xf32>
    %30 = arith.mulf %27, %29 : vector<16x32xf32>
    %c88 = arith.constant 88 : index
    %c0_10 = arith.constant 0 : index
    %31 = vector.load %arg1[%c88, %c0_10] : memref<632x32xf32, #tpu.memory_space<vmem>>, vector<1x32xf32>
    %32 = vector.broadcast %31 : vector<1x32xf32> to vector<16x32xf32>
    %33 = arith.addf %30, %32 : vector<16x32xf32>
    %c0_11 = arith.constant 0 : index
    %c0_12 = arith.constant 0 : index
    %34 = vector.load %arg2[%c0_11, %c0_12] : memref<184x128xf32, #tpu.memory_space<vmem>>, vector<32x64xf32>
    %cst_13 = arith.constant dense<0.000000e+00> : vector<16x64xf32>
    %35 = tpu.matmul %33, %34, %cst_13 {dimension_numbers = #tpu.dot_dimension_numbers<[1], [0], [0], [1], [0, 0, 1, 1], [], []>} : vector<16x32xf32>, vector<32x64xf32>, vector<16x64xf32> -> vector<16x64xf32>
    %36 = vector.extract_strided_slice %35 {offsets = [0, 0], sizes = [16, 32], strides = [1, 1]} : vector<16x64xf32> to vector<16x32xf32>
    %37 = vector.extract_strided_slice %35 {offsets = [0, 32], sizes = [16, 32], strides = [1, 1]} : vector<16x64xf32> to vector<16x32xf32>
    %c96 = arith.constant 96 : index
    %c0_14 = arith.constant 0 : index
    %38 = vector.load %arg1[%c96, %c0_14] : memref<632x32xf32, #tpu.memory_space<vmem>>, vector<8x16xf32>
    %cst_15 = arith.constant dense<0.000000e+00> : vector<8x32xf32>
    %39 = tpu.matmul %38, %37, %cst_15 {dimension_numbers = #tpu.dot_dimension_numbers<[1], [0], [0], [1], [0, 0, 1, 1], [], []>} : vector<8x16xf32>, vector<16x32xf32>, vector<8x32xf32> -> vector<8x32xf32>
    %c184 = arith.constant 184 : index
    %c0_16 = arith.constant 0 : index
    %40 = vector.load %arg1[%c184, %c0_16] : memref<632x32xf32, #tpu.memory_space<vmem>>, vector<32x8xf32>
    %c104 = arith.constant 104 : index
    %c0_17 = arith.constant 0 : index
    %41 = vector.load %arg1[%c104, %c0_17] : memref<632x32xf32, #tpu.memory_space<vmem>>, vector<32x32xf32>
    %cst_18 = arith.constant dense<0.000000e+00> : vector<32x8xf32>
    %42 = tpu.matmul %41, %39, %cst_18 {dimension_numbers = #tpu.dot_dimension_numbers<[1], [1], [0], [0], [0, 0, 1, 0], [], []>} : vector<32x32xf32>, vector<8x32xf32>, vector<32x8xf32> -> vector<32x8xf32>
    %43 = arith.mulf %42, %40 : vector<32x8xf32>
    %c136 = arith.constant 136 : index
    %c0_19 = arith.constant 0 : index
    %44 = vector.load %arg1[%c136, %c0_19] : memref<632x32xf32, #tpu.memory_space<vmem>>, vector<32x32xf32>
    %cst_20 = arith.constant dense<0.000000e+00> : vector<32x8xf32>
    %45 = tpu.matmul %44, %39, %cst_20 {dimension_numbers = #tpu.dot_dimension_numbers<[1], [1], [0], [0], [0, 0, 1, 0], [], []>} : vector<32x32xf32>, vector<8x32xf32>, vector<32x8xf32> -> vector<32x8xf32>
    %46 = arith.mulf %45, %40 : vector<32x8xf32>
    %c168 = arith.constant 168 : index
    %c0_21 = arith.constant 0 : index
    %47 = vector.load %arg1[%c168, %c0_21] : memref<632x32xf32, #tpu.memory_space<vmem>>, vector<8x32xf32>
    %cst_22 = arith.constant dense<0.000000e+00> : vector<32x32xf32>
    %48 = tpu.matmul %43, %47, %cst_22 {dimension_numbers = #tpu.dot_dimension_numbers<[1], [0], [0], [1], [0, 0, 1, 1], [], []>} : vector<32x8xf32>, vector<8x32xf32>, vector<32x32xf32> -> vector<32x32xf32>
    %c176 = arith.constant 176 : index
    %c0_23 = arith.constant 0 : index
    %49 = vector.load %arg1[%c176, %c0_23] : memref<632x32xf32, #tpu.memory_space<vmem>>, vector<8x32xf32>
    %cst_24 = arith.constant dense<0.000000e+00> : vector<32x32xf32>
    %50 = tpu.matmul %46, %49, %cst_24 {dimension_numbers = #tpu.dot_dimension_numbers<[1], [0], [0], [1], [0, 0, 1, 1], [], []>} : vector<32x8xf32>, vector<8x32xf32>, vector<32x32xf32> -> vector<32x32xf32>
    %51 = arith.addf %48, %50 : vector<32x32xf32>
    %c216 = arith.constant 216 : index
    %c0_25 = arith.constant 0 : index
    %52 = vector.load %arg1[%c216, %c0_25] : memref<632x32xf32, #tpu.memory_space<vmem>>, vector<32x32xf32>
    %53 = arith.mulf %51, %52 : vector<32x32xf32>
    %cst_26 = arith.constant dense<0.000000e+00> : vector<16x32xf32>
    %54 = tpu.matmul %36, %53, %cst_26 {dimension_numbers = #tpu.dot_dimension_numbers<[1], [1], [0], [0], [0, 0, 1, 0], [], []>} : vector<16x32xf32>, vector<32x32xf32>, vector<16x32xf32> -> vector<16x32xf32>
    %c280 = arith.constant 280 : index
    %c0_27 = arith.constant 0 : index
    %55 = vector.load %arg1[%c280, %c0_27] : memref<632x32xf32, #tpu.memory_space<vmem>>, vector<16x32xf32>
    %56 = arith.addf %54, %55 : vector<16x32xf32>
    %cst_28 = arith.constant dense<0xFF800000> : vector<16xf32>
    %57 = vector.multi_reduction <maximumf>, %56, %cst_28 [1] : vector<16x32xf32> to vector<16xf32>
    %58 = vector.shape_cast %57 : vector<16xf32> to vector<16x1xf32>
    %59 = vector.broadcast %58 : vector<16x1xf32> to vector<16x32xf32>
    %60 = arith.subf %56, %59 : vector<16x32xf32>
    %61 = math.exp %60 : vector<16x32xf32>
    %c248 = arith.constant 248 : index
    %c0_29 = arith.constant 0 : index
    %62 = vector.load %arg1[%c248, %c0_29] : memref<632x32xf32, #tpu.memory_space<vmem>>, vector<32x32xf32>
    %cst_30 = arith.constant dense<0.000000e+00> : vector<16x32xf32>
    %63 = tpu.matmul %61, %62, %cst_30 {dimension_numbers = #tpu.dot_dimension_numbers<[1], [0], [0], [1], [0, 0, 1, 1], [], []>} : vector<16x32xf32>, vector<32x32xf32>, vector<16x32xf32> -> vector<16x32xf32>
    %64 = arith.divf %61, %63 : vector<16x32xf32>
    %65 = tpu.concatenate %39, %39, %39, %39 in 0 : vector<8x32xf32>, vector<8x32xf32>, vector<8x32xf32>, vector<8x32xf32> -> vector<32x32xf32>
    %c296 = arith.constant 296 : index
    %c0_31 = arith.constant 0 : index
    %66 = vector.load %arg1[%c296, %c0_31] : memref<632x32xf32, #tpu.memory_space<vmem>>, vector<32x32xf32>
    %67 = arith.mulf %65, %66 : vector<32x32xf32>
    %cst_32 = arith.constant dense<0.000000e+00> : vector<16x32xf32>
    %68 = tpu.matmul %64, %67, %cst_32 {dimension_numbers = #tpu.dot_dimension_numbers<[1], [0], [0], [1], [0, 0, 1, 1], [], []>} : vector<16x32xf32>, vector<32x32xf32>, vector<16x32xf32> -> vector<16x32xf32>
    %69 = arith.addf %33, %68 : vector<16x32xf32>
    %c64_33 = arith.constant 64 : index
    %c0_34 = arith.constant 0 : index
    %70 = vector.load %arg2[%c64_33, %c0_34] : memref<184x128xf32, #tpu.memory_space<vmem>>, vector<32x128xf32>
    %cst_35 = arith.constant dense<0.000000e+00> : vector<16x128xf32>
    %71 = tpu.matmul %69, %70, %cst_35 {dimension_numbers = #tpu.dot_dimension_numbers<[1], [0], [0], [1], [0, 0, 1, 1], [], []>} : vector<16x32xf32>, vector<32x128xf32>, vector<16x128xf32> -> vector<16x128xf32>
    %c128 = arith.constant 128 : index
    %c0_36 = arith.constant 0 : index
    %72 = vector.load %arg2[%c128, %c0_36] : memref<184x128xf32, #tpu.memory_space<vmem>>, vector<1x128xf32>
    %73 = vector.broadcast %72 : vector<1x128xf32> to vector<16x128xf32>
    %74 = arith.addf %71, %73 : vector<16x128xf32>
    %cst_37 = arith.constant 5.000000e-01 : f32
    %75 = vector.broadcast %cst_37 : f32 to vector<16x128xf32>
    %76 = arith.mulf %75, %74 : vector<16x128xf32>
    %cst_38 = arith.constant 0.707106769 : f32
    %77 = vector.broadcast %cst_38 : f32 to vector<16x128xf32>
    %78 = arith.mulf %74, %77 : vector<16x128xf32>
    %79 = math.erf %78 : vector<16x128xf32>
    %cst_39 = arith.constant 1.000000e+00 : f32
    %80 = vector.broadcast %cst_39 : f32 to vector<16x128xf32>
    %81 = arith.addf %80, %79 : vector<16x128xf32>
    %82 = arith.mulf %76, %81 : vector<16x128xf32>
    %c64_i32 = arith.constant 64 : i32
    %83 = tpu.dynamic_rotate %74 by %c64_i32 dim 1 : vector<16x128xf32>, i32 -> vector<16x128xf32>
    %84 = arith.mulf %82, %83 : vector<16x128xf32>
    %c360 = arith.constant 360 : index
    %c0_40 = arith.constant 0 : index
    %85 = vector.load %arg1[%c360, %c0_40] : memref<632x32xf32, #tpu.memory_space<vmem>>, vector<128x32xf32>
    %cst_41 = arith.constant dense<0.000000e+00> : vector<16x32xf32>
    %86 = tpu.matmul %84, %85, %cst_41 {dimension_numbers = #tpu.dot_dimension_numbers<[1], [0], [0], [1], [0, 0, 1, 1], [], []>} : vector<16x128xf32>, vector<128x32xf32>, vector<16x32xf32> -> vector<16x32xf32>
    %87 = arith.addf %69, %86 : vector<16x32xf32>
    %c616 = arith.constant 616 : index
    %c0_42 = arith.constant 0 : index
    %88 = vector.load %arg1[%c616, %c0_42] : memref<632x32xf32, #tpu.memory_space<vmem>>, vector<1x32xf32>
    %89 = vector.broadcast %88 : vector<1x32xf32> to vector<16x32xf32>
    %90 = arith.addf %87, %89 : vector<16x32xf32>
    %c32 = arith.constant 32 : index
    %c0_43 = arith.constant 0 : index
    %91 = vector.load %arg2[%c32, %c0_43] : memref<184x128xf32, #tpu.memory_space<vmem>>, vector<32x64xf32>
    %cst_44 = arith.constant dense<0.000000e+00> : vector<16x64xf32>
    %92 = tpu.matmul %90, %91, %cst_44 {dimension_numbers = #tpu.dot_dimension_numbers<[1], [0], [0], [1], [0, 0, 1, 1], [], []>} : vector<16x32xf32>, vector<32x64xf32>, vector<16x64xf32> -> vector<16x64xf32>
    %93 = vector.extract_strided_slice %92 {offsets = [0, 0], sizes = [16, 32], strides = [1, 1]} : vector<16x64xf32> to vector<16x32xf32>
    %94 = vector.extract_strided_slice %92 {offsets = [0, 32], sizes = [16, 32], strides = [1, 1]} : vector<16x64xf32> to vector<16x32xf32>
    %c96_45 = arith.constant 96 : index
    %c0_46 = arith.constant 0 : index
    %95 = vector.load %arg1[%c96_45, %c0_46] : memref<632x32xf32, #tpu.memory_space<vmem>>, vector<8x16xf32>
    %cst_47 = arith.constant dense<0.000000e+00> : vector<8x32xf32>
    %96 = tpu.matmul %95, %94, %cst_47 {dimension_numbers = #tpu.dot_dimension_numbers<[1], [0], [0], [1], [0, 0, 1, 1], [], []>} : vector<8x16xf32>, vector<16x32xf32>, vector<8x32xf32> -> vector<8x32xf32>
    %c184_48 = arith.constant 184 : index
    %c0_49 = arith.constant 0 : index
    %97 = vector.load %arg1[%c184_48, %c0_49] : memref<632x32xf32, #tpu.memory_space<vmem>>, vector<32x8xf32>
    %c104_50 = arith.constant 104 : index
    %c0_51 = arith.constant 0 : index
    %98 = vector.load %arg1[%c104_50, %c0_51] : memref<632x32xf32, #tpu.memory_space<vmem>>, vector<32x32xf32>
    %cst_52 = arith.constant dense<0.000000e+00> : vector<32x8xf32>
    %99 = tpu.matmul %98, %96, %cst_52 {dimension_numbers = #tpu.dot_dimension_numbers<[1], [1], [0], [0], [0, 0, 1, 0], [], []>} : vector<32x32xf32>, vector<8x32xf32>, vector<32x8xf32> -> vector<32x8xf32>
    %100 = arith.mulf %99, %97 : vector<32x8xf32>
    %c136_53 = arith.constant 136 : index
    %c0_54 = arith.constant 0 : index
    %101 = vector.load %arg1[%c136_53, %c0_54] : memref<632x32xf32, #tpu.memory_space<vmem>>, vector<32x32xf32>
    %cst_55 = arith.constant dense<0.000000e+00> : vector<32x8xf32>
    %102 = tpu.matmul %101, %96, %cst_55 {dimension_numbers = #tpu.dot_dimension_numbers<[1], [1], [0], [0], [0, 0, 1, 0], [], []>} : vector<32x32xf32>, vector<8x32xf32>, vector<32x8xf32> -> vector<32x8xf32>
    %103 = arith.mulf %102, %97 : vector<32x8xf32>
    %c168_56 = arith.constant 168 : index
    %c0_57 = arith.constant 0 : index
    %104 = vector.load %arg1[%c168_56, %c0_57] : memref<632x32xf32, #tpu.memory_space<vmem>>, vector<8x32xf32>
    %cst_58 = arith.constant dense<0.000000e+00> : vector<32x32xf32>
    %105 = tpu.matmul %100, %104, %cst_58 {dimension_numbers = #tpu.dot_dimension_numbers<[1], [0], [0], [1], [0, 0, 1, 1], [], []>} : vector<32x8xf32>, vector<8x32xf32>, vector<32x32xf32> -> vector<32x32xf32>
    %c176_59 = arith.constant 176 : index
    %c0_60 = arith.constant 0 : index
    %106 = vector.load %arg1[%c176_59, %c0_60] : memref<632x32xf32, #tpu.memory_space<vmem>>, vector<8x32xf32>
    %cst_61 = arith.constant dense<0.000000e+00> : vector<32x32xf32>
    %107 = tpu.matmul %103, %106, %cst_61 {dimension_numbers = #tpu.dot_dimension_numbers<[1], [0], [0], [1], [0, 0, 1, 1], [], []>} : vector<32x8xf32>, vector<8x32xf32>, vector<32x32xf32> -> vector<32x32xf32>
    %108 = arith.addf %105, %107 : vector<32x32xf32>
    %c216_62 = arith.constant 216 : index
    %c0_63 = arith.constant 0 : index
    %109 = vector.load %arg1[%c216_62, %c0_63] : memref<632x32xf32, #tpu.memory_space<vmem>>, vector<32x32xf32>
    %110 = arith.mulf %108, %109 : vector<32x32xf32>
    %cst_64 = arith.constant dense<0.000000e+00> : vector<16x32xf32>
    %111 = tpu.matmul %93, %110, %cst_64 {dimension_numbers = #tpu.dot_dimension_numbers<[1], [1], [0], [0], [0, 0, 1, 0], [], []>} : vector<16x32xf32>, vector<32x32xf32>, vector<16x32xf32> -> vector<16x32xf32>
    %c280_65 = arith.constant 280 : index
    %c0_66 = arith.constant 0 : index
    %112 = vector.load %arg1[%c280_65, %c0_66] : memref<632x32xf32, #tpu.memory_space<vmem>>, vector<16x32xf32>
    %113 = arith.addf %111, %112 : vector<16x32xf32>
    %cst_67 = arith.constant dense<0xFF800000> : vector<16xf32>
    %114 = vector.multi_reduction <maximumf>, %113, %cst_67 [1] : vector<16x32xf32> to vector<16xf32>
    %115 = vector.shape_cast %114 : vector<16xf32> to vector<16x1xf32>
    %116 = vector.broadcast %115 : vector<16x1xf32> to vector<16x32xf32>
    %117 = arith.subf %113, %116 : vector<16x32xf32>
    %118 = math.exp %117 : vector<16x32xf32>
    %c248_68 = arith.constant 248 : index
    %c0_69 = arith.constant 0 : index
    %119 = vector.load %arg1[%c248_68, %c0_69] : memref<632x32xf32, #tpu.memory_space<vmem>>, vector<32x32xf32>
    %cst_70 = arith.constant dense<0.000000e+00> : vector<16x32xf32>
    %120 = tpu.matmul %118, %119, %cst_70 {dimension_numbers = #tpu.dot_dimension_numbers<[1], [0], [0], [1], [0, 0, 1, 1], [], []>} : vector<16x32xf32>, vector<32x32xf32>, vector<16x32xf32> -> vector<16x32xf32>
    %121 = arith.divf %118, %120 : vector<16x32xf32>
    %122 = tpu.concatenate %96, %96, %96, %96 in 0 : vector<8x32xf32>, vector<8x32xf32>, vector<8x32xf32>, vector<8x32xf32> -> vector<32x32xf32>
    %c328 = arith.constant 328 : index
    %c0_71 = arith.constant 0 : index
    %123 = vector.load %arg1[%c328, %c0_71] : memref<632x32xf32, #tpu.memory_space<vmem>>, vector<32x32xf32>
    %124 = arith.mulf %122, %123 : vector<32x32xf32>
    %cst_72 = arith.constant dense<0.000000e+00> : vector<16x32xf32>
    %125 = tpu.matmul %121, %124, %cst_72 {dimension_numbers = #tpu.dot_dimension_numbers<[1], [0], [0], [1], [0, 0, 1, 1], [], []>} : vector<16x32xf32>, vector<32x32xf32>, vector<16x32xf32> -> vector<16x32xf32>
    %126 = arith.addf %90, %125 : vector<16x32xf32>
    %c96_73 = arith.constant 96 : index
    %c0_74 = arith.constant 0 : index
    %127 = vector.load %arg2[%c96_73, %c0_74] : memref<184x128xf32, #tpu.memory_space<vmem>>, vector<32x128xf32>
    %cst_75 = arith.constant dense<0.000000e+00> : vector<16x128xf32>
    %128 = tpu.matmul %126, %127, %cst_75 {dimension_numbers = #tpu.dot_dimension_numbers<[1], [0], [0], [1], [0, 0, 1, 1], [], []>} : vector<16x32xf32>, vector<32x128xf32>, vector<16x128xf32> -> vector<16x128xf32>
    %c136_76 = arith.constant 136 : index
    %c0_77 = arith.constant 0 : index
    %129 = vector.load %arg2[%c136_76, %c0_77] : memref<184x128xf32, #tpu.memory_space<vmem>>, vector<1x128xf32>
    %130 = vector.broadcast %129 : vector<1x128xf32> to vector<16x128xf32>
    %131 = arith.addf %128, %130 : vector<16x128xf32>
    %cst_78 = arith.constant 5.000000e-01 : f32
    %132 = vector.broadcast %cst_78 : f32 to vector<16x128xf32>
    %133 = arith.mulf %132, %131 : vector<16x128xf32>
    %cst_79 = arith.constant 0.707106769 : f32
    %134 = vector.broadcast %cst_79 : f32 to vector<16x128xf32>
    %135 = arith.mulf %131, %134 : vector<16x128xf32>
    %136 = math.erf %135 : vector<16x128xf32>
    %cst_80 = arith.constant 1.000000e+00 : f32
    %137 = vector.broadcast %cst_80 : f32 to vector<16x128xf32>
    %138 = arith.addf %137, %136 : vector<16x128xf32>
    %139 = arith.mulf %133, %138 : vector<16x128xf32>
    %c64_i32_81 = arith.constant 64 : i32
    %140 = tpu.dynamic_rotate %131 by %c64_i32_81 dim 1 : vector<16x128xf32>, i32 -> vector<16x128xf32>
    %141 = arith.mulf %139, %140 : vector<16x128xf32>
    %c488 = arith.constant 488 : index
    %c0_82 = arith.constant 0 : index
    %142 = vector.load %arg1[%c488, %c0_82] : memref<632x32xf32, #tpu.memory_space<vmem>>, vector<128x32xf32>
    %cst_83 = arith.constant dense<0.000000e+00> : vector<16x32xf32>
    %143 = tpu.matmul %141, %142, %cst_83 {dimension_numbers = #tpu.dot_dimension_numbers<[1], [0], [0], [1], [0, 0, 1, 1], [], []>} : vector<16x128xf32>, vector<128x32xf32>, vector<16x32xf32> -> vector<16x32xf32>
    %144 = arith.addf %126, %143 : vector<16x32xf32>
    %c624 = arith.constant 624 : index
    %c0_84 = arith.constant 0 : index
    %145 = vector.load %arg1[%c624, %c0_84] : memref<632x32xf32, #tpu.memory_space<vmem>>, vector<1x32xf32>
    %146 = vector.broadcast %145 : vector<1x32xf32> to vector<16x32xf32>
    %147 = arith.addf %144, %146 : vector<16x32xf32>
    %c144 = arith.constant 144 : index
    %c0_85 = arith.constant 0 : index
    %148 = vector.load %arg2[%c144, %c0_85] : memref<184x128xf32, #tpu.memory_space<vmem>>, vector<32x128xf32>
    %cst_86 = arith.constant dense<0.000000e+00> : vector<16x128xf32>
    %149 = tpu.matmul %147, %148, %cst_86 {dimension_numbers = #tpu.dot_dimension_numbers<[1], [0], [0], [1], [0, 0, 1, 1], [], []>} : vector<16x32xf32>, vector<32x128xf32>, vector<16x128xf32> -> vector<16x128xf32>
    %c176_87 = arith.constant 176 : index
    %c0_88 = arith.constant 0 : index
    %150 = vector.load %arg2[%c176_87, %c0_88] : memref<184x128xf32, #tpu.memory_space<vmem>>, vector<1x128xf32>
    %151 = vector.broadcast %150 : vector<1x128xf32> to vector<16x128xf32>
    %152 = arith.addf %149, %151 : vector<16x128xf32>
    %c0_89 = arith.constant 0 : index
    %c0_90 = arith.constant 0 : index
    %153 = vector.load %arg3[%c0_89, %c0_90] : memref<16x128xf32, #tpu.memory_space<vmem>>, vector<16x128xf32>
    tpu.vector_store %arg3[%c0_89, %c0_90], %152 {strides = array<i32>} : memref<16x128xf32, #tpu.memory_space<vmem>>, vector<16x128xf32>,
    return
  }
}

</mosaic_0001>

<llo_original>
// kernel: bonz_lm_forward.1
$region0: #{bonz_lm_forward.1}
  #allocation0 [shape = 'u32[]', space=smem, size = 0x4, offset = 0x4, fixed_abs, tag = 'smem constant byte address 0x4 - core index']
  #allocation1 [shape = 'u32[144,128]{1,0:T(1,128)}', space=vmem, size = 0x12000, scoped, tag = 'internal scratch']
  %s0 = inlined_call_operand.vmem [shape: s32[16,1], index: 0, kind: input, shape index: {}]
  %s1 = inlined_call_operand.vmem [shape: f32[632,32], index: 1, kind: input, shape index: {}]
  %s2 = inlined_call_operand.vmem [shape: f32[184,128], index: 2, kind: input, shape index: {}]
  %s3 = inlined_call_operand.vmem [shape: f32[16,128], index: 3, kind: output, shape index: {}]
  %s4 = sld [smem:[#allocation0]]
  $region22: #{bonz_lm_forward.1} parent=0
    _
  %s6 = ssub.s32 1, %s4
  %s7 = scalar_select 0, %s6, %s4
  // Predicated region
  $region2: #{bonz_lm_forward.1} parent=0 // pred_check
    _
  $region3: #{bonz_lm_forward.1} parent=0 // pred_check_branch
    %9 = sbr.rel (0) target = $region5
  $region4: #{bonz_lm_forward.1} parent=0 // pred_region
    _
  $region5: #{bonz_lm_forward.1} parent=0 // pred_fallthru
    _
  // Predicated region
  $region6: #{bonz_lm_forward.1} parent=0 // pred_check
    _
  $region7: #{bonz_lm_forward.1} parent=0 // pred_check_branch
    %11 = sbr.rel (0) target = $region9
  $region8: #{bonz_lm_forward.1} parent=0 // pred_region
    _
  $region9: #{bonz_lm_forward.1} parent=0 // pred_fallthru
    _
  // Predicated region
  $region10: #{bonz_lm_forward.1} parent=0 // pred_check
    _
  $region11: #{bonz_lm_forward.1} parent=0 // pred_check_branch
    %13 = sbr.rel (0) target = $region13
  $region12: #{bonz_lm_forward.1} parent=0 // pred_region
    _
  $region13: #{bonz_lm_forward.1} parent=0 // pred_fallthru
    _
  %v14 = vlaneseq
  %v15 = vand.u32 %v14, 127
  %v16 = vld [vmem:[%s0] sm:$0xff]
  %v17 = vld [vmem:[%s0 + $0x8] sm:$0xff]
  %18 = vset.pattern.permute.xlu0 0
  %19 = vperm.xlu0 %18, %v16
  %v20 = vpop.permute.xlu0 %19
  %21 = vset.pattern.permute.xlu0 0
  %22 = vperm.xlu0 %21, %v17
  %v23 = vpop.permute.xlu0 %22
  %vm24 = vcmp.eq.s32.totalorder %v15, %v20
  %vm25 = vcmp.eq.s32.totalorder %v15, %v23
  %v26 = vsel %vm24, 1, 0
  %v27 = vsel %vm25, 1, 0
  %v28 = vcvt.s32.f32 %v26
  %v29 = vcvt.s32.f32 %v27
  %v30 = vld [vmem:[%s1] sm:$0xff]
  %v31 = vld [vmem:[%s1 + $0x8] sm:$0xff]
  %v32 = vld [vmem:[%s1 + $0x10] sm:$0xff]
  %v33 = vld [vmem:[%s1 + $0x18] sm:$0xff]
  %v34 = vld [vmem:[%s1 + $0x20] sm:$0xff]
  %v35 = vld [vmem:[%s1 + $0x28] sm:$0xff]
  %v36 = vld [vmem:[%s1 + $0x30] sm:$0xff]
  %v37 = vld [vmem:[%s1 + $0x38] sm:$0xff]
  %v38 = vld [vmem:[%s1 + $0x40] sm:$0xff]
  %v39 = vld [vmem:[%s1 + $0x48] sm:$0xff]
  %vm40 = vcmask 523264
  %v42 = vsel %vm40, %v28, 0
  %v45 = vsel %vm40, %v29, 0
  %47 = vmatprep.subr.mxu0 0.0
  %48 = vmatpush1.msra.mxu0 %v30
  %49 = vmatprep.subr.mxu0 0.0
  %50 = vmatpush1.msra.mxu0 %v31
  %51 = vmatprep.subr.mxu0 0.0
  %52 = vmatpush1.msra.mxu0 %v32
  %53 = vmatprep.subr.mxu0 0.0
  %54 = vmatpush1.msra.mxu0 %v33
  %55 = vmatprep.subr.mxu0 0.0
  %56 = vmatpush1.msra.mxu0 %v34
  %57 = vmatprep.subr.mxu0 0.0
  %58 = vmatpush1.msra.mxu0 %v35
  %59 = vmatprep.subr.mxu0 0.0
  %60 = vmatpush1.msra.mxu0 %v36
  %61 = vmatprep.subr.mxu0 0.0
  %62 = vmatpush1.msra.mxu0 %v37
  %63 = vmatprep.subr.mxu0 0.0
  %64 = vmatpush1.msra.mxu0 0.0
  %65 = vmatprep.subr.mxu0 0.0
  %66 = vmatpush1.msra.mxu0 0.0
  %67 = vmatprep.subr.mxu0 0.0
  %68 = vmatpush1.msra.mxu0 0.0
  %69 = vmatprep.subr.mxu0 0.0
  %70 = vmatpush1.msra.mxu0 0.0
  %71 = vmatprep.subr.mxu0 0.0
  %72 = vmatpush1.msra.mxu0 0.0
  %73 = vmatprep.subr.mxu0 0.0
  %74 = vmatpush1.msra.mxu0 0.0
  %75 = vmatprep.subr.mxu0 0.0
  %76 = vmatpush1.msra.mxu0 0.0
  %77 = vmatprep.subr.mxu0 0.0
  %78 = vmatpush1.msra.mxu0 0.0
  %79 = vmatprep.subr.mxu0 0.0
  %80 = vmatpush1.msra.mxu0 0.0
  %81 = vmatprep.subr.mxu0 0.0
  %82 = vmatpush1.msra.mxu0 0.0
  %83 = vmatprep.subr.mxu0 0.0
  %84 = vmatpush1.msra.mxu0 0.0
  %85 = vmatprep.subr.mxu0 0.0
  %86 = vmatpush1.msra.mxu0 0.0
  %87 = vmatprep.subr.mxu0 0.0
  %88 = vmatpush1.msra.mxu0 0.0
  %89 = vmatprep.subr.mxu0 0.0
  %90 = vmatpush1.msra.mxu0 0.0
  %91 = vmatprep.subr.mxu0 0.0
  %92 = vmatpush1.msra.mxu0 0.0
  %93 = vmatprep.subr.mxu0 0.0
  %94 = vmatpush1.msra.mxu0 0.0
  %95 = vmatprep.subr.mxu0 0.0
  %96 = vmatpush1.msra.mxu0 0.0
  %97 = vmatprep.subr.mxu0 0.0
  %98 = vmatpush1.msra.mxu0 0.0
  %99 = vmatprep.subr.mxu0 0.0
  %100 = vmatpush1.msra.mxu0 0.0
  %101 = vmatprep.subr.mxu0 0.0
  %102 = vmatpush1.msra.mxu0 0.0
  %103 = vmatprep.subr.mxu0 0.0
  %104 = vmatpush1.msra.mxu0 0.0
  %105 = vmatprep.subr.mxu0 0.0
  %106 = vmatpush1.msra.mxu0 0.0
  %107 = vmatprep.subr.mxu0 0.0
  %108 = vmatpush1.msra.mxu0 0.0
  %109 = vmatprep.subr.mxu0 0.0
  %110 = vmatpush1.msra.mxu0 0.0
  %111 = vmatprep.mubr.f32.mxu0 0.0
  %112 = vmatmul.mubr.f32.gmra.mrb[0].mxu0 %v42
  %v113 = vpop.f32.mrb[0].mxu0
  %v114 = vadd.f32 %v38, %v113
  %v115 = vpop.f32.mrb[0].mxu0
  %116 = vmatprep.mubr.f32.mxu0 0.0
  %117 = vmatmul.mubr.f32.gmra.mrb[0].mxu0 %v45
  %v118 = vpop.f32.mrb[0].mxu0
  %v119 = vadd.f32 %v39, %v118
  %v120 = vpop.f32.mrb[0].mxu0
  %121 = vdwg.mxu0
  %vm122 = vcmask 261120
  %v123 = vsel %vm122, %v114, 0.0
  %124 = vadd.xlane.f32.xlu0 %v123
  %v125 = vpop.xlane.xlu0 %124
  %v126 = vsel %vm122, %v119, 0.0
  %127 = vadd.xlane.f32.xlu0 %v126
  %v128 = vpop.xlane.xlu0 %127
  %v129 = vrcp.pop 32.0
  %v130 = vmul.f32 %v125, %v129
  %v131 = vmul.f32 %v128, %v129
  %v132 = vsub.f32 %v114, %v130
  %v133 = vsub.f32 %v119, %v131
  %v134 = vmul.f32 %v132, %v132
  %v135 = vmul.f32 %v133, %v133
  %v136 = vsel %vm122, %v134, 0.0
  %137 = vadd.xlane.f32.xlu0 %v136
  %v138 = vpop.xlane.xlu0 %137
  %v139 = vsel %vm122, %v135, 0.0
  %140 = vadd.xlane.f32.xlu0 %v139
  %v141 = vpop.xlane.xlu0 %140
  %v142 = vmul.f32 %v138, %v129
  %v143 = vmul.f32 %v141, %v129
  %v144 = vadd.f32 %v142, 1e-12
  %v145 = vadd.f32 %v143, 1e-12
  %v146 = vrsqrt.pop %v144
  %v147 = vrsqrt.pop %v145
  %v148 = vmul.f32 %v132, %v146
  %v149 = vmul.f32 %v133, %v147
  %v150 = vld [vmem:[%s1 + $0x50] sm:$0x1]
  %v151 = vlaneseq
  %v152 = vshrl.u32 %v151, 7
  %v153 = vsub.s32 0, %v152
  %v154 = vrot.slane %v150, %v153
  %v155 = vmul.f32 %v148, %v154
  %v156 = vmul.f32 %v149, %v154
  %v157 = vld [vmem:[%s1 + $0x58] sm:$0x1]
  %v158 = vlaneseq
  %v159 = vshrl.u32 %v158, 7
  %v160 = vsub.s32 0, %v159
  %v161 = vrot.slane %v157, %v160
  %v162 = vadd.f32 %v155, %v161
  %v163 = vadd.f32 %v156, %v161
  %v164 = vld [vmem:[%s2] sm:$0xff]
  %v165 = vld [vmem:[%s2 + $0x8] sm:$0xff]
  %v166 = vld [vmem:[%s2 + $0x10] sm:$0xff]
  %v167 = vld [vmem:[%s2 + $0x18] sm:$0xff]
  %v169 = vsel %vm122, %v162, 0
  %v172 = vsel %vm122, %v163, 0
  %174 = vmatprep.subr.mxu0 0.0
  %175 = vmatpush1.msra.mxu0 %v164
  %176 = vmatprep.subr.mxu0 0.0
  %177 = vmatpush1.msra.mxu0 %v165
  %178 = vmatprep.subr.mxu0 0.0
  %179 = vmatpush1.msra.mxu0 %v166
  %180 = vmatprep.subr.mxu0 0.0
  %181 = vmatpush1.msra.mxu0 %v167
  %182 = vmatprep.subr.mxu0 0.0
  %183 = vmatpush1.msra.mxu0 0.0
  %184 = vmatprep.subr.mxu0 0.0
  %185 = vmatpush1.msra.mxu0 0.0
  %186 = vmatprep.subr.mxu0 0.0
  %187 = vmatpush1.msra.mxu0 0.0
  %188 = vmatprep.subr.mxu0 0.0
  %189 = vmatpush1.msra.mxu0 0.0
  %190 = vmatprep.subr.mxu0 0.0
  %191 = vmatpush1.msra.mxu0 0.0
  %192 = vmatprep.subr.mxu0 0.0
  %193 = vmatpush1.msra.mxu0 0.0
  %194 = vmatprep.subr.mxu0 0.0
  %195 = vmatpush1.msra.mxu0 0.0
  %196 = vmatprep.subr.mxu0 0.0
  %197 = vmatpush1.msra.mxu0 0.0
  %198 = vmatprep.subr.mxu0 0.0
  %199 = vmatpush1.msra.mxu0 0.0
  %200 = vmatprep.subr.mxu0 0.0
  %201 = vmatpush1.msra.mxu0 0.0
  %202 = vmatprep.subr.mxu0 0.0
  %203 = vmatpush1.msra.mxu0 0.0
  %204 = vmatprep.subr.mxu0 0.0
  %205 = vmatpush1.msra.mxu0 0.0
  %206 = vmatprep.subr.mxu0 0.0
  %207 = vmatpush1.msra.mxu0 0.0
  %208 = vmatprep.subr.mxu0 0.0
  %209 = vmatpush1.msra.mxu0 0.0
  %210 = vmatprep.subr.mxu0 0.0
  %211 = vmatpush1.msra.mxu0 0.0
  %212 = vmatprep.subr.mxu0 0.0
  %213 = vmatpush1.msra.mxu0 0.0
  %214 = vmatprep.subr.mxu0 0.0
  %215 = vmatpush1.msra.mxu0 0.0
  %216 = vmatprep.subr.mxu0 0.0
  %217 = vmatpush1.msra.mxu0 0.0
  %218 = vmatprep.subr.mxu0 0.0
  %219 = vmatpush1.msra.mxu0 0.0
  %220 = vmatprep.subr.mxu0 0.0
  %221 = vmatpush1.msra.mxu0 0.0
  %222 = vmatprep.subr.mxu0 0.0
  %223 = vmatpush1.msra.mxu0 0.0
  %224 = vmatprep.subr.mxu0 0.0
  %225 = vmatpush1.msra.mxu0 0.0
  %226 = vmatprep.subr.mxu0 0.0
  %227 = vmatpush1.msra.mxu0 0.0
  %228 = vmatprep.subr.mxu0 0.0
  %229 = vmatpush1.msra.mxu0 0.0
  %230 = vmatprep.subr.mxu0 0.0
  %231 = vmatpush1.msra.mxu0 0.0
  %232 = vmatprep.subr.mxu0 0.0
  %233 = vmatpush1.msra.mxu0 0.0
  %234 = vmatprep.subr.mxu0 0.0
  %235 = vmatpush1.msra.mxu0 0.0
  %236 = vmatprep.subr.mxu0 0.0
  %237 = vmatpush1.msra.mxu0 0.0
  %238 = vmatprep.mubr.f32.mxu0 0.0
  %239 = vmatmul.mubr.f32.gmra.mrb[0].mxu0 %v169
  %v240 = vpop.f32.mrb[0].mxu0
  %v241 = vadd.f32 0.0, %v240
  %v242 = vpop.f32.mrb[0].mxu0
  %243 = vmatprep.mubr.f32.mxu0 0.0
  %244 = vmatmul.mubr.f32.gmra.mrb[0].mxu0 %v172
  %v245 = vpop.f32.mrb[0].mxu0
  %v246 = vadd.f32 0.0, %v245
  %v247 = vpop.f32.mrb[0].mxu0
  %248 = vdwg.mxu0
  %v249 = vld [vmem:[%s1 + $0x60] sm:$0xff]
  %252 = vrot.lane.b32.xlu0 %v241, 96
  %v253 = vpop.permute.xlu0 %252
  %254 = vrot.lane.b32.xlu0 %v246, 96
  %v255 = vpop.permute.xlu0 %254
  %vm258 = vcmask 130048
  %v260 = vsel %vm258, %v249, 0
  %262 = vmatprep.subr.mxu0 0.0
  %263 = vmatpush1.msra.mxu0 %v253
  %264 = vmatprep.subr.mxu0 0.0
  %265 = vmatpush1.msra.mxu0 %v255
  %266 = vmatprep.subr.mxu0 0.0
  %267 = vmatpush1.msra.mxu0 0.0
  %268 = vmatprep.subr.mxu0 0.0
  %269 = vmatpush1.msra.mxu0 0.0
  %270 = vmatprep.subr.mxu0 0.0
  %271 = vmatpush1.msra.mxu0 0.0
  %272 = vmatprep.subr.mxu0 0.0
  %273 = vmatpush1.msra.mxu0 0.0
  %274 = vmatprep.subr.mxu0 0.0
  %275 = vmatpush1.msra.mxu0 0.0
  %276 = vmatprep.subr.mxu0 0.0
  %277 = vmatpush1.msra.mxu0 0.0
  %278 = vmatprep.subr.mxu0 0.0
  %279 = vmatpush1.msra.mxu0 0.0
  %280 = vmatprep.subr.mxu0 0.0
  %281 = vmatpush1.msra.mxu0 0.0
  %282 = vmatprep.subr.mxu0 0.0
  %283 = vmatpush1.msra.mxu0 0.0
  %284 = vmatprep.subr.mxu0 0.0
  %285 = vmatpush1.msra.mxu0 0.0
  %286 = vmatprep.subr.mxu0 0.0
  %287 = vmatpush1.msra.mxu0 0.0
  %288 = vmatprep.subr.mxu0 0.0
  %289 = vmatpush1.msra.mxu0 0.0
  %290 = vmatprep.subr.mxu0 0.0
  %291 = vmatpush1.msra.mxu0 0.0
  %292 = vmatprep.subr.mxu0 0.0
  %293 = vmatpush1.msra.mxu0 0.0
  %294 = vmatprep.subr.mxu0 0.0
  %295 = vmatpush1.msra.mxu0 0.0
  %296 = vmatprep.subr.mxu0 0.0
  %297 = vmatpush1.msra.mxu0 0.0
  %298 = vmatprep.subr.mxu0 0.0
  %299 = vmatpush1.msra.mxu0 0.0
  %300 = vmatprep.subr.mxu0 0.0
  %301 = vmatpush1.msra.mxu0 0.0
  %302 = vmatprep.subr.mxu0 0.0
  %303 = vmatpush1.msra.mxu0 0.0
  %304 = vmatprep.subr.mxu0 0.0
  %305 = vmatpush1.msra.mxu0 0.0
  %306 = vmatprep.subr.mxu0 0.0
  %307 = vmatpush1.msra.mxu0 0.0
  %308 = vmatprep.subr.mxu0 0.0
  %309 = vmatpush1.msra.mxu0 0.0
  %310 = vmatprep.subr.mxu0 0.0
  %311 = vmatpush1.msra.mxu0 0.0
  %312 = vmatprep.subr.mxu0 0.0
  %313 = vmatpush1.msra.mxu0 0.0
  %314 = vmatprep.subr.mxu0 0.0
  %315 = vmatpush1.msra.mxu0 0.0
  %316 = vmatprep.subr.mxu0 0.0
  %317 = vmatpush1.msra.mxu0 0.0
  %318 = vmatprep.subr.mxu0 0.0
  %319 = vmatpush1.msra.mxu0 0.0
  %320 = vmatprep.subr.mxu0 0.0
  %321 = vmatpush1.msra.mxu0 0.0
  %322 = vmatprep.subr.mxu0 0.0
  %323 = vmatpush1.msra.mxu0 0.0
  %324 = vmatprep.subr.mxu0 0.0
  %325 = vmatpush1.msra.mxu0 0.0
  %326 = vmatprep.mubr.f32.mxu0 0.0
  %327 = vmatmul.mubr.f32.gmra.mrb[0].mxu0 %v260
  %v328 = vpop.f32.mrb[0].mxu0
  %v329 = vadd.f32 0.0, %v328
  %v330 = vpop.f32.mrb[0].mxu0
  %331 = vdwg.mxu0
  %v332 = vld [vmem:[%s1 + $0xb8] sm:$0xff]
  %v333 = vld [vmem:[%s1 + $0xc0] sm:$0xff]
  %v334 = vld [vmem:[%s1 + $0xc8] sm:$0xff]
  %v335 = vld [vmem:[%s1 + $0xd0] sm:$0xff]
  %v336 = vld [vmem:[%s1 + $0x68] sm:$0xff]
  %v337 = vld [vmem:[%s1 + $0x70] sm:$0xff]
  %v338 = vld [vmem:[%s1 + $0x78] sm:$0xff]
  %v339 = vld [vmem:[%s1 + $0x80] sm:$0xff]
  %v341 = vsel %vm122, %v336, 0
  %v344 = vsel %vm122, %v337, 0
  %v347 = vsel %vm122, %v338, 0
  %v350 = vsel %vm122, %v339, 0
  %v353 = vsel %vm122, %v329, 0
  %355 = vmatprep.subr.mxu0 0.0
  %356 = vmatpush1.xpose.msra.mxu0 %v353
  %357 = vmatprep.subr.mxu0 0.0
  %358 = vmatpush1.xpose.msra.mxu0 0.0
  %359 = vmatprep.subr.mxu0 0.0
  %360 = vmatpush1.xpose.msra.mxu0 0.0
  %361 = vmatprep.subr.mxu0 0.0
  %362 = vmatpush1.xpose.msra.mxu0 0.0
  %363 = vmatprep.subr.mxu0 0.0
  %364 = vmatpush1.xpose.msra.mxu0 0.0
  %365 = vmatprep.subr.mxu0 0.0
  %366 = vmatpush1.xpose.msra.mxu0 0.0
  %367 = vmatprep.subr.mxu0 0.0
  %368 = vmatpush1.xpose.msra.mxu0 0.0
  %369 = vmatprep.subr.mxu0 0.0
  %370 = vmatpush1.xpose.msra.mxu0 0.0
  %371 = vmatprep.subr.mxu0 0.0
  %372 = vmatpush1.xpose.msra.mxu0 0.0
  %373 = vmatprep.subr.mxu0 0.0
  %374 = vmatpush1.xpose.msra.mxu0 0.0
  %375 = vmatprep.subr.mxu0 0.0
  %376 = vmatpush1.xpose.msra.mxu0 0.0
  %377 = vmatprep.subr.mxu0 0.0
  %378 = vmatpush1.xpose.msra.mxu0 0.0
  %379 = vmatprep.subr.mxu0 0.0
  %380 = vmatpush1.xpose.msra.mxu0 0.0
  %381 = vmatprep.subr.mxu0 0.0
  %382 = vmatpush1.xpose.msra.mxu0 0.0
  %383 = vmatprep.subr.mxu0 0.0
  %384 = vmatpush1.xpose.msra.mxu0 0.0
  %385 = vmatprep.subr.mxu0 0.0
  %386 = vmatpush1.xpose.msra.mxu0 0.0
  %387 = vmatprep.subr.mxu0 0.0
  %388 = vmatpush1.xpose.msra.mxu0 0.0
  %389 = vmatprep.subr.mxu0 0.0
  %390 = vmatpush1.xpose.msra.mxu0 0.0
  %391 = vmatprep.subr.mxu0 0.0
  %392 = vmatpush1.xpose.msra.mxu0 0.0
  %393 = vmatprep.subr.mxu0 0.0
  %394 = vmatpush1.xpose.msra.mxu0 0.0
  %395 = vmatprep.subr.mxu0 0.0
  %396 = vmatpush1.xpose.msra.mxu0 0.0
  %397 = vmatprep.subr.mxu0 0.0
  %398 = vmatpush1.xpose.msra.mxu0 0.0
  %399 = vmatprep.subr.mxu0 0.0
  %400 = vmatpush1.xpose.msra.mxu0 0.0
  %401 = vmatprep.subr.mxu0 0.0
  %402 = vmatpush1.xpose.msra.mxu0 0.0
  %403 = vmatprep.subr.mxu0 0.0
  %404 = vmatpush1.xpose.msra.mxu0 0.0
  %405 = vmatprep.subr.mxu0 0.0
  %406 = vmatpush1.xpose.msra.mxu0 0.0
  %407 = vmatprep.subr.mxu0 0.0
  %408 = vmatpush1.xpose.msra.mxu0 0.0
  %409 = vmatprep.subr.mxu0 0.0
  %410 = vmatpush1.xpose.msra.mxu0 0.0
  %411 = vmatprep.subr.mxu0 0.0
  %412 = vmatpush1.xpose.msra.mxu0 0.0
  %413 = vmatprep.subr.mxu0 0.0
  %414 = vmatpush1.xpose.msra.mxu0 0.0
  %415 = vmatprep.subr.mxu0 0.0
  %416 = vmatpush1.xpose.msra.mxu0 0.0
  %417 = vmatprep.subr.mxu0 0.0
  %418 = vmatpush1.xpose.msra.mxu0 0.0
  %419 = vmatprep.mubr.f32.mxu0 0.0
  %420 = vmatmul.mubr.f32.gmra.mrb[0].mxu0 %v341
  %v421 = vpop.f32.mrb[0].mxu0
  %v422 = vadd.f32 0.0, %v421
  %v423 = vpop.f32.mrb[0].mxu0
  %424 = vmatprep.mubr.f32.mxu0 0.0
  %425 = vmatmul.mubr.f32.gmra.mrb[0].mxu0 %v344
  %v426 = vpop.f32.mrb[0].mxu0
  %v427 = vadd.f32 0.0, %v426
  %v428 = vpop.f32.mrb[0].mxu0
  %429 = vmatprep.mubr.f32.mxu0 0.0
  %430 = vmatmul.mubr.f32.gmra.mrb[0].mxu0 %v347
  %v431 = vpop.f32.mrb[0].mxu0
  %v432 = vadd.f32 0.0, %v431
  %v433 = vpop.f32.mrb[0].mxu0
  %434 = vmatprep.mubr.f32.mxu0 0.0
  %435 = vmatmul.mubr.f32.gmra.mrb[0].mxu0 %v350
  %v436 = vpop.f32.mrb[0].mxu0
  %v437 = vadd.f32 0.0, %v436
  %v438 = vpop.f32.mrb[0].mxu0
  %439 = vdwg.mxu0
  %v440 = vmul.f32 %v422, %v332
  %v441 = vmul.f32 %v427, %v333
  %v442 = vmul.f32 %v432, %v334
  %v443 = vmul.f32 %v437, %v335
  %v444 = vld [vmem:[%s1 + $0x88] sm:$0xff]
  %v445 = vld [vmem:[%s1 + $0x90] sm:$0xff]
  %v446 = vld [vmem:[%s1 + $0x98] sm:$0xff]
  %v447 = vld [vmem:[%s1 + $0xa0] sm:$0xff]
  %v449 = vsel %vm122, %v444, 0
  %v452 = vsel %vm122, %v445, 0
  %v455 = vsel %vm122, %v446, 0
  %v458 = vsel %vm122, %v447, 0
  %460 = vmatprep.subr.mxu0 0.0
  %461 = vmatpush1.xpose.msra.mxu0 %v353
  %462 = vmatprep.subr.mxu0 0.0
  %463 = vmatpush1.xpose.msra.mxu0 0.0
  %464 = vmatprep.subr.mxu0 0.0
  %465 = vmatpush1.xpose.msra.mxu0 0.0
  %466 = vmatprep.subr.mxu0 0.0
  %467 = vmatpush1.xpose.msra.mxu0 0.0
  %468 = vmatprep.subr.mxu0 0.0
  %469 = vmatpush1.xpose.msra.mxu0 0.0
  %470 = vmatprep.subr.mxu0 0.0
  %471 = vmatpush1.xpose.msra.mxu0 0.0
  %472 = vmatprep.subr.mxu0 0.0
  %473 = vmatpush1.xpose.msra.mxu0 0.0
  %474 = vmatprep.subr.mxu0 0.0
  %475 = vmatpush1.xpose.msra.mxu0 0.0
  %476 = vmatprep.subr.mxu0 0.0
  %477 = vmatpush1.xpose.msra.mxu0 0.0
  %478 = vmatprep.subr.mxu0 0.0
  %479 = vmatpush1.xpose.msra.mxu0 0.0
  %480 = vmatprep.subr.mxu0 0.0
  %481 = vmatpush1.xpose.msra.mxu0 0.0
  %482 = vmatprep.subr.mxu0 0.0
  %483 = vmatpush1.xpose.msra.mxu0 0.0
  %484 = vmatprep.subr.mxu0 0.0
  %485 = vmatpush1.xpose.msra.mxu0 0.0
  %486 = vmatprep.subr.mxu0 0.0
  %487 = vmatpush1.xpose.msra.mxu0 0.0
  %488 = vmatprep.subr.mxu0 0.0
  %489 = vmatpush1.xpose.msra.mxu0 0.0
  %490 = vmatprep.subr.mxu0 0.0
  %491 = vmatpush1.xpose.msra.mxu0 0.0
  %492 = vmatprep.subr.mxu0 0.0
  %493 = vmatpush1.xpose.msra.mxu0 0.0
  %494 = vmatprep.subr.mxu0 0.0
  %495 = vmatpush1.xpose.msra.mxu0 0.0
  %496 = vmatprep.subr.mxu0 0.0
  %497 = vmatpush1.xpose.msra.mxu0 0.0
  %498 = vmatprep.subr.mxu0 0.0
  %499 = vmatpush1.xpose.msra.mxu0 0.0
  %500 = vmatprep.subr.mxu0 0.0
  %501 = vmatpush1.xpose.msra.mxu0 0.0
  %502 = vmatprep.subr.mxu0 0.0
  %503 = vmatpush1.xpose.msra.mxu0 0.0
  %504 = vmatprep.subr.mxu0 0.0
  %505 = vmatpush1.xpose.msra.mxu0 0.0
  %506 = vmatprep.subr.mxu0 0.0
  %507 = vmatpush1.xpose.msra.mxu0 0.0
  %508 = vmatprep.subr.mxu0 0.0
  %509 = vmatpush1.xpose.msra.mxu0 0.0
  %510 = vmatprep.subr.mxu0 0.0
  %511 = vmatpush1.xpose.msra.mxu0 0.0
  %512 = vmatprep.subr.mxu0 0.0
  %513 = vmatpush1.xpose.msra.mxu0 0.0
  %514 = vmatprep.subr.mxu0 0.0
  %515 = vmatpush1.xpose.msra.mxu0 0.0
  %516 = vmatprep.subr.mxu0 0.0
  %517 = vmatpush1.xpose.msra.mxu0 0.0
  %518 = vmatprep.subr.mxu0 0.0
  %519 = vmatpush1.xpose.msra.mxu0 0.0
  %520 = vmatprep.subr.mxu0 0.0
  %521 = vmatpush1.xpose.msra.mxu0 0.0
  %522 = vmatprep.subr.mxu0 0.0
  %523 = vmatpush1.xpose.msra.mxu0 0.0
  %524 = vmatprep.mubr.f32.mxu0 0.0
  %525 = vmatmul.mubr.f32.gmra.mrb[0].mxu0 %v449
  %v526 = vpop.f32.mrb[0].mxu0
  %v527 = vadd.f32 0.0, %v526
  %v528 = vpop.f32.mrb[0].mxu0
  %529 = vmatprep.mubr.f32.mxu0 0.0
  %530 = vmatmul.mubr.f32.gmra.mrb[0].mxu0 %v452
  %v531 = vpop.f32.mrb[0].mxu0
  %v532 = vadd.f32 0.0, %v531
  %v533 = vpop.f32.mrb[0].mxu0
  %534 = vmatprep.mubr.f32.mxu0 0.0
  %535 = vmatmul.mubr.f32.gmra.mrb[0].mxu0 %v455
  %v536 = vpop.f32.mrb[0].mxu0
  %v537 = vadd.f32 0.0, %v536
  %v538 = vpop.f32.mrb[0].mxu0
  %539 = vmatprep.mubr.f32.mxu0 0.0
  %540 = vmatmul.mubr.f32.gmra.mrb[0].mxu0 %v458
  %v541 = vpop.f32.mrb[0].mxu0
  %v542 = vadd.f32 0.0, %v541
  %v543 = vpop.f32.mrb[0].mxu0
  %544 = vdwg.mxu0
  %v545 = vmul.f32 %v527, %v332
  %v546 = vmul.f32 %v532, %v333
  %v547 = vmul.f32 %v537, %v334
  %v548 = vmul.f32 %v542, %v335
  %v549 = vld [vmem:[%s1 + $0xa8] sm:$0xff]
  %v550 = vld [vmem:[%s1 + $0xb0] sm:$0xff]
  %vm551 = vcmask 64512
  %v553 = vsel %vm551, %v545, 0
  %v556 = vsel %vm551, %v546, 0
  %v559 = vsel %vm551, %v547, 0
  %v562 = vsel %vm551, %v548, 0
  %564 = vmatprep.subr.mxu0 0.0
  %565 = vmatpush1.msra.mxu0 %v550
  %566 = vmatprep.subr.mxu0 0.0
  %567 = vmatpush1.msra.mxu0 0.0
  %568 = vmatprep.subr.mxu0 0.0
  %569 = vmatpush1.msra.mxu0 0.0
  %570 = vmatprep.subr.mxu0 0.0
  %571 = vmatpush1.msra.mxu0 0.0
  %572 = vmatprep.subr.mxu0 0.0
  %573 = vmatpush1.msra.mxu0 0.0
  %574 = vmatprep.subr.mxu0 0.0
  %575 = vmatpush1.msra.mxu0 0.0
  %576 = vmatprep.subr.mxu0 0.0
  %577 = vmatpush1.msra.mxu0 0.0
  %578 = vmatprep.subr.mxu0 0.0
  %579 = vmatpush1.msra.mxu0 0.0
  %580 = vmatprep.subr.mxu0 0.0
  %581 = vmatpush1.msra.mxu0 0.0
  %582 = vmatprep.subr.mxu0 0.0
  %583 = vmatpush1.msra.mxu0 0.0
  %584 = vmatprep.subr.mxu0 0.0
  %585 = vmatpush1.msra.mxu0 0.0
  %586 = vmatprep.subr.mxu0 0.0
  %587 = vmatpush1.msra.mxu0 0.0
  %588 = vmatprep.subr.mxu0 0.0
  %589 = vmatpush1.msra.mxu0 0.0
  %590 = vmatprep.subr.mxu0 0.0
  %591 = vmatpush1.msra.mxu0 0.0
  %592 = vmatprep.subr.mxu0 0.0
  %593 = vmatpush1.msra.mxu0 0.0
  %594 = vmatprep.subr.mxu0 0.0
  %595 = vmatpush1.msra.mxu0 0.0
  %596 = vmatprep.subr.mxu0 0.0
  %597 = vmatpush1.msra.mxu0 0.0
  %598 = vmatprep.subr.mxu0 0.0
  %599 = vmatpush1.msra.mxu0 0.0
  %600 = vmatprep.subr.mxu0 0.0
  %601 = vmatpush1.msra.mxu0 0.0
  %602 = vmatprep.subr.mxu0 0.0
  %603 = vmatpush1.msra.mxu0 0.0
  %604 = vmatprep.subr.mxu0 0.0
  %605 = vmatpush1.msra.mxu0 0.0
  %606 = vmatprep.subr.mxu0 0.0
  %607 = vmatpush1.msra.mxu0 0.0
  %608 = vmatprep.subr.mxu0 0.0
  %609 = vmatpush1.msra.mxu0 0.0
  %610 = vmatprep.subr.mxu0 0.0
  %611 = vmatpush1.msra.mxu0 0.0
  %612 = vmatprep.subr.mxu0 0.0
  %613 = vmatpush1.msra.mxu0 0.0
  %614 = vmatprep.subr.mxu0 0.0
  %615 = vmatpush1.msra.mxu0 0.0
  %616 = vmatprep.subr.mxu0 0.0
  %617 = vmatpush1.msra.mxu0 0.0
  %618 = vmatprep.subr.mxu0 0.0
  %619 = vmatpush1.msra.mxu0 0.0
  %620 = vmatprep.subr.mxu0 0.0
  %621 = vmatpush1.msra.mxu0 0.0
  %622 = vmatprep.subr.mxu0 0.0
  %623 = vmatpush1.msra.mxu0 0.0
  %624 = vmatprep.subr.mxu0 0.0
  %625 = vmatpush1.msra.mxu0 0.0
  %626 = vmatprep.subr.mxu0 0.0
  %627 = vmatpush1.msra.mxu0 0.0
  %628 = vmatprep.mubr.f32.mxu0 0.0
  %629 = vmatmul.mubr.f32.gmra.mrb[0].mxu0 %v553
  %v630 = vpop.f32.mrb[0].mxu0
  %v631 = vadd.f32 0.0, %v630
  %v632 = vpop.f32.mrb[0].mxu0
  %633 = vmatprep.mubr.f32.mxu0 0.0
  %634 = vmatmul.mubr.f32.gmra.mrb[0].mxu0 %v556
  %v635 = vpop.f32.mrb[0].mxu0
  %v636 = vadd.f32 0.0, %v635
  %v637 = vpop.f32.mrb[0].mxu0
  %638 = vmatprep.mubr.f32.mxu0 0.0
  %639 = vmatmul.mubr.f32.gmra.mrb[0].mxu0 %v559
  %v640 = vpop.f32.mrb[0].mxu0
  %v641 = vadd.f32 0.0, %v640
  %v642 = vpop.f32.mrb[0].mxu0
  %643 = vmatprep.mubr.f32.mxu0 0.0
  %644 = vmatmul.mubr.f32.gmra.mrb[0].mxu0 %v562
  %v645 = vpop.f32.mrb[0].mxu0
  %v646 = vadd.f32 0.0, %v645
  %v647 = vpop.f32.mrb[0].mxu0
  %648 = vdwg.mxu0
  %v650 = vsel %vm551, %v440, 0
  %v653 = vsel %vm551, %v441, 0
  %v656 = vsel %vm551, %v442, 0
  %v659 = vsel %vm551, %v443, 0
  %661 = vmatprep.subr.mxu0 0.0
  %662 = vmatpush1.msra.mxu0 %v549
  %663 = vmatprep.subr.mxu0 0.0
  %664 = vmatpush1.msra.mxu0 0.0
  %665 = vmatprep.subr.mxu0 0.0
  %666 = vmatpush1.msra.mxu0 0.0
  %667 = vmatprep.subr.mxu0 0.0
  %668 = vmatpush1.msra.mxu0 0.0
  %669 = vmatprep.subr.mxu0 0.0
  %670 = vmatpush1.msra.mxu0 0.0
  %671 = vmatprep.subr.mxu0 0.0
  %672 = vmatpush1.msra.mxu0 0.0
  %673 = vmatprep.subr.mxu0 0.0
  %674 = vmatpush1.msra.mxu0 0.0
  %675 = vmatprep.subr.mxu0 0.0
  %676 = vmatpush1.msra.mxu0 0.0
  %677 = vmatprep.subr.mxu0 0.0
  %678 = vmatpush1.msra.mxu0 0.0
  %679 = vmatprep.subr.mxu0 0.0
  %680 = vmatpush1.msra.mxu0 0.0
  %681 = vmatprep.subr.mxu0 0.0
  %682 = vmatpush1.msra.mxu0 0.0
  %683 = vmatprep.subr.mxu0 0.0
  %684 = vmatpush1.msra.mxu0 0.0
  %685 = vmatprep.subr.mxu0 0.0
  %686 = vmatpush1.msra.mxu0 0.0
  %687 = vmatprep.subr.mxu0 0.0
  %688 = vmatpush1.msra.mxu0 0.0
  %689 = vmatprep.subr.mxu0 0.0
  %690 = vmatpush1.msra.mxu0 0.0
  %691 = vmatprep.subr.mxu0 0.0
  %692 = vmatpush1.msra.mxu0 0.0
  %693 = vmatprep.subr.mxu0 0.0
  %694 = vmatpush1.msra.mxu0 0.0
  %695 = vmatprep.subr.mxu0 0.0
  %696 = vmatpush1.msra.mxu0 0.0
  %697 = vmatprep.subr.mxu0 0.0
  %698 = vmatpush1.msra.mxu0 0.0
  %699 = vmatprep.subr.mxu0 0.0
  %700 = vmatpush1.msra.mxu0 0.0
  %701 = vmatprep.subr.mxu0 0.0
  %702 = vmatpush1.msra.mxu0 0.0
  %703 = vmatprep.subr.mxu0 0.0
  %704 = vmatpush1.msra.mxu0 0.0
  %705 = vmatprep.subr.mxu0 0.0
  %706 = vmatpush1.msra.mxu0 0.0
  %707 = vmatprep.subr.mxu0 0.0
  %708 = vmatpush1.msra.mxu0 0.0
  %709 = vmatprep.subr.mxu0 0.0
  %710 = vmatpush1.msra.mxu0 0.0
  %711 = vmatprep.subr.mxu0 0.0
  %712 = vmatpush1.msra.mxu0 0.0
  %713 = vmatprep.subr.mxu0 0.0
  %714 = vmatpush1.msra.mxu0 0.0
  %715 = vmatprep.subr.mxu0 0.0
  %716 = vmatpush1.msra.mxu0 0.0
  %717 = vmatprep.subr.mxu0 0.0
  %718 = vmatpush1.msra.mxu0 0.0
  %719 = vmatprep.subr.mxu0 0.0
  %720 = vmatpush1.msra.mxu0 0.0
  %721 = vmatprep.subr.mxu0 0.0
  %722 = vmatpush1.msra.mxu0 0.0
  %723 = vmatprep.subr.mxu0 0.0
  %724 = vmatpush1.msra.mxu0 0.0
  %725 = vmatprep.mubr.f32.mxu0 0.0
  %726 = vmatmul.mubr.f32.gmra.mrb[0].mxu0 %v650
  %v727 = vpop.f32.mrb[0].mxu0
  %v728 = vadd.f32 %v631, %v727
  %v729 = vpop.f32.mrb[0].mxu0
  %730 = vmatprep.mubr.f32.mxu0 0.0
  %731 = vmatmul.mubr.f32.gmra.mrb[0].mxu0 %v653
  %v732 = vpop.f32.mrb[0].mxu0
  %v733 = vadd.f32 %v636, %v732
  %v734 = vpop.f32.mrb[0].mxu0
  %735 = vmatprep.mubr.f32.mxu0 0.0
  %736 = vmatmul.mubr.f32.gmra.mrb[0].mxu0 %v656
  %v737 = vpop.f32.mrb[0].mxu0
  %v738 = vadd.f32 %v641, %v737
  %v739 = vpop.f32.mrb[0].mxu0
  %740 = vmatprep.mubr.f32.mxu0 0.0
  %741 = vmatmul.mubr.f32.gmra.mrb[0].mxu0 %v659
  %v742 = vpop.f32.mrb[0].mxu0
  %v743 = vadd.f32 %v646, %v742
  %v744 = vpop.f32.mrb[0].mxu0
  %745 = vdwg.mxu0
  %v746 = vld [vmem:[%s1 + $0xd8] sm:$0xff]
  %v747 = vld [vmem:[%s1 + $0xe0] sm:$0xff]
  %v748 = vld [vmem:[%s1 + $0xe8] sm:$0xff]
  %v749 = vld [vmem:[%s1 + $0xf0] sm:$0xff]
  %v750 = vmul.f32 %v728, %v746
  %v751 = vmul.f32 %v733, %v747
  %v752 = vmul.f32 %v738, %v748
  %v753 = vmul.f32 %v743, %v749
  %v754 = vld [vmem:[%s1 + $0x118] sm:$0xff]
  %v755 = vld [vmem:[%s1 + $0x120] sm:$0xff]
  %v756 = vsel %vm122, %v241, 0
  %v758 = vsel %vm122, %v246, 0
  %v761 = vsel %vm122, %v750, 0
  %v764 = vsel %vm122, %v751, 0
  %v767 = vsel %vm122, %v752, 0
  %v770 = vsel %vm122, %v753, 0
  %772 = vmatprep.subr.mxu0 0.0
  %773 = vmatpush1.xpose.msra.mxu0 %v761
  %774 = vmatprep.subr.mxu0 0.0
  %775 = vmatpush1.xpose.msra.mxu0 %v764
  %776 = vmatprep.subr.mxu0 0.0
  %777 = vmatpush1.xpose.msra.mxu0 %v767
  %778 = vmatprep.subr.mxu0 0.0
  %779 = vmatpush1.xpose.msra.mxu0 %v770
  %780 = vmatprep.subr.mxu0 0.0
  %781 = vmatpush1.xpose.msra.mxu0 0.0
  %782 = vmatprep.subr.mxu0 0.0
  %783 = vmatpush1.xpose.msra.mxu0 0.0
  %784 = vmatprep.subr.mxu0 0.0
  %785 = vmatpush1.xpose.msra.mxu0 0.0
  %786 = vmatprep.subr.mxu0 0.0
  %787 = vmatpush1.xpose.msra.mxu0 0.0
  %788 = vmatprep.subr.mxu0 0.0
  %789 = vmatpush1.xpose.msra.mxu0 0.0
  %790 = vmatprep.subr.mxu0 0.0
  %791 = vmatpush1.xpose.msra.mxu0 0.0
  %792 = vmatprep.subr.mxu0 0.0
  %793 = vmatpush1.xpose.msra.mxu0 0.0
  %794 = vmatprep.subr.mxu0 0.0
  %795 = vmatpush1.xpose.msra.mxu0 0.0
  %796 = vmatprep.subr.mxu0 0.0
  %797 = vmatpush1.xpose.msra.mxu0 0.0
  %798 = vmatprep.subr.mxu0 0.0
  %799 = vmatpush1.xpose.msra.mxu0 0.0
  %800 = vmatprep.subr.mxu0 0.0
  %801 = vmatpush1.xpose.msra.mxu0 0.0
  %802 = vmatprep.subr.mxu0 0.0
  %803 = vmatpush1.xpose.msra.mxu0 0.0
  %804 = vmatprep.subr.mxu0 0.0
  %805 = vmatpush1.xpose.msra.mxu0 0.0
  %806 = vmatprep.subr.mxu0 0.0
  %807 = vmatpush1.xpose.msra.mxu0 0.0
  %808 = vmatprep.subr.mxu0 0.0
  %809 = vmatpush1.xpose.msra.mxu0 0.0
  %810 = vmatprep.subr.mxu0 0.0
  %811 = vmatpush1.xpose.msra.mxu0 0.0
  %812 = vmatprep.subr.mxu0 0.0
  %813 = vmatpush1.xpose.msra.mxu0 0.0
  %814 = vmatprep.subr.mxu0 0.0
  %815 = vmatpush1.xpose.msra.mxu0 0.0
  %816 = vmatprep.subr.mxu0 0.0
  %817 = vmatpush1.xpose.msra.mxu0 0.0
  %818 = vmatprep.subr.mxu0 0.0
  %819 = vmatpush1.xpose.msra.mxu0 0.0
  %820 = vmatprep.subr.mxu0 0.0
  %821 = vmatpush1.xpose.msra.mxu0 0.0
  %822 = vmatprep.subr.mxu0 0.0
  %823 = vmatpush1.xpose.msra.mxu0 0.0
  %824 = vmatprep.subr.mxu0 0.0
  %825 = vmatpush1.xpose.msra.mxu0 0.0
  %826 = vmatprep.subr.mxu0 0.0
  %827 = vmatpush1.xpose.msra.mxu0 0.0
  %828 = vmatprep.subr.mxu0 0.0
  %829 = vmatpush1.xpose.msra.mxu0 0.0
  %830 = vmatprep.subr.mxu0 0.0
  %831 = vmatpush1.xpose.msra.mxu0 0.0
  %832 = vmatprep.subr.mxu0 0.0
  %833 = vmatpush1.xpose.msra.mxu0 0.0
  %834 = vmatprep.subr.mxu0 0.0
  %835 = vmatpush1.xpose.msra.mxu0 0.0
  %836 = vmatprep.mubr.f32.mxu0 0.0
  %837 = vmatmul.mubr.f32.gmra.mrb[0].mxu0 %v756
  %v838 = vpop.f32.mrb[0].mxu0
  %v839 = vadd.f32 %v754, %v838
  %v840 = vpop.f32.mrb[0].mxu0
  %841 = vmatprep.mubr.f32.mxu0 0.0
  %842 = vmatmul.mubr.f32.gmra.mrb[0].mxu0 %v758
  %v843 = vpop.f32.mrb[0].mxu0
  %v844 = vadd.f32 %v755, %v843
  %v845 = vpop.f32.mrb[0].mxu0
  %846 = vdwg.mxu0
  %v847 = vsel %vm122, %v839, -inf
  %848 = vmax.xlane.f32.xlu0 %v847
  %v849 = vpop.xlane.xlu0 %848
  %v850 = vsel %vm122, %v844, -inf
  %851 = vmax.xlane.f32.xlu0 %v850
  %v852 = vpop.xlane.xlu0 %851
  %v853 = vsub.f32 %v839, %v849
  %v854 = vsub.f32 %v844, %v852
  %v855 = vmul.f32 %v853, 1.442695
  %v856 = vpow.pop %v855
  %v857 = vmul.f32 %v854, 1.442695
  %v858 = vpow.pop %v857
  %v859 = vld [vmem:[%s1 + $0xf8] sm:$0xff]
  %v860 = vld [vmem:[%s1 + $0x100] sm:$0xff]
  %v861 = vld [vmem:[%s1 + $0x108] sm:$0xff]
  %v862 = vld [vmem:[%s1 + $0x110] sm:$0xff]
  %v864 = vsel %vm122, %v856, 0
  %v867 = vsel %vm122, %v858, 0
  %869 = vmatprep.subr.mxu0 0.0
  %870 = vmatpush1.msra.mxu0 %v859
  %871 = vmatprep.subr.mxu0 0.0
  %872 = vmatpush1.msra.mxu0 %v860
  %873 = vmatprep.subr.mxu0 0.0
  %874 = vmatpush1.msra.mxu0 %v861
  %875 = vmatprep.subr.mxu0 0.0
  %876 = vmatpush1.msra.mxu0 %v862
  %877 = vmatprep.subr.mxu0 0.0
  %878 = vmatpush1.msra.mxu0 0.0
  %879 = vmatprep.subr.mxu0 0.0
  %880 = vmatpush1.msra.mxu0 0.0
  %881 = vmatprep.subr.mxu0 0.0
  %882 = vmatpush1.msra.mxu0 0.0
  %883 = vmatprep.subr.mxu0 0.0
  %884 = vmatpush1.msra.mxu0 0.0
  %885 = vmatprep.subr.mxu0 0.0
  %886 = vmatpush1.msra.mxu0 0.0
  %887 = vmatprep.subr.mxu0 0.0
  %888 = vmatpush1.msra.mxu0 0.0
  %889 = vmatprep.subr.mxu0 0.0
  %890 = vmatpush1.msra.mxu0 0.0
  %891 = vmatprep.subr.mxu0 0.0
  %892 = vmatpush1.msra.mxu0 0.0
  %893 = vmatprep.subr.mxu0 0.0
  %894 = vmatpush1.msra.mxu0 0.0
  %895 = vmatprep.subr.mxu0 0.0
  %896 = vmatpush1.msra.mxu0 0.0
  %897 = vmatprep.subr.mxu0 0.0
  %898 = vmatpush1.msra.mxu0 0.0
  %899 = vmatprep.subr.mxu0 0.0
  %900 = vmatpush1.msra.mxu0 0.0
  %901 = vmatprep.subr.mxu0 0.0
  %902 = vmatpush1.msra.mxu0 0.0
  %903 = vmatprep.subr.mxu0 0.0
  %904 = vmatpush1.msra.mxu0 0.0
  %905 = vmatprep.subr.mxu0 0.0
  %906 = vmatpush1.msra.mxu0 0.0
  %907 = vmatprep.subr.mxu0 0.0
  %908 = vmatpush1.msra.mxu0 0.0
  %909 = vmatprep.subr.mxu0 0.0
  %910 = vmatpush1.msra.mxu0 0.0
  %911 = vmatprep.subr.mxu0 0.0
  %912 = vmatpush1.msra.mxu0 0.0
  %913 = vmatprep.subr.mxu0 0.0
  %914 = vmatpush1.msra.mxu0 0.0
  %915 = vmatprep.subr.mxu0 0.0
  %916 = vmatpush1.msra.mxu0 0.0
  %917 = vmatprep.subr.mxu0 0.0
  %918 = vmatpush1.msra.mxu0 0.0
  %919 = vmatprep.subr.mxu0 0.0
  %920 = vmatpush1.msra.mxu0 0.0
  %921 = vmatprep.subr.mxu0 0.0
  %922 = vmatpush1.msra.mxu0 0.0
  %923 = vmatprep.subr.mxu0 0.0
  %924 = vmatpush1.msra.mxu0 0.0
  %925 = vmatprep.subr.mxu0 0.0
  %926 = vmatpush1.msra.mxu0 0.0
  %927 = vmatprep.subr.mxu0 0.0
  %928 = vmatpush1.msra.mxu0 0.0
  %929 = vmatprep.subr.mxu0 0.0
  %930 = vmatpush1.msra.mxu0 0.0
  %931 = vmatprep.subr.mxu0 0.0
  %932 = vmatpush1.msra.mxu0 0.0
  %933 = vmatprep.mubr.f32.mxu0 0.0
  %934 = vmatmul.mubr.f32.gmra.mrb[0].mxu0 %v864
  %v935 = vpop.f32.mrb[0].mxu0
  %v936 = vadd.f32 0.0, %v935
  %v937 = vpop.f32.mrb[0].mxu0
  %938 = vmatprep.mubr.f32.mxu0 0.0
  %939 = vmatmul.mubr.f32.gmra.mrb[0].mxu0 %v867
  %v940 = vpop.f32.mrb[0].mxu0
  %v941 = vadd.f32 0.0, %v940
  %v942 = vpop.f32.mrb[0].mxu0
  %943 = vdwg.mxu0
  %v944 = vrcp.pop %v936
  %v945 = vmul.f32 %v856, %v944
  %v946 = vrcp.pop %v941
  %v947 = vmul.f32 %v858, %v946
  %v948 = vld [vmem:[%s1 + $0x128] sm:$0xff]
  %v949 = vld [vmem:[%s1 + $0x130] sm:$0xff]
  %v950 = vld [vmem:[%s1 + $0x138] sm:$0xff]
  %v951 = vld [vmem:[%s1 + $0x140] sm:$0xff]
  %v952 = vmul.f32 %v329, %v948
  %v953 = vmul.f32 %v329, %v949
  %v954 = vmul.f32 %v329, %v950
  %v955 = vmul.f32 %v329, %v951
  %v957 = vsel %vm122, %v945, 0
  %v960 = vsel %vm122, %v947, 0
  %962 = vmatprep.subr.mxu0 0.0
  %963 = vmatpush1.msra.mxu0 %v952
  %964 = vmatprep.subr.mxu0 0.0
  %965 = vmatpush1.msra.mxu0 %v953
  %966 = vmatprep.subr.mxu0 0.0
  %967 = vmatpush1.msra.mxu0 %v954
  %968 = vmatprep.subr.mxu0 0.0
  %969 = vmatpush1.msra.mxu0 %v955
  %970 = vmatprep.subr.mxu0 0.0
  %971 = vmatpush1.msra.mxu0 0.0
  %972 = vmatprep.subr.mxu0 0.0
  %973 = vmatpush1.msra.mxu0 0.0
  %974 = vmatprep.subr.mxu0 0.0
  %975 = vmatpush1.msra.mxu0 0.0
  %976 = vmatprep.subr.mxu0 0.0
  %977 = vmatpush1.msra.mxu0 0.0
  %978 = vmatprep.subr.mxu0 0.0
  %979 = vmatpush1.msra.mxu0 0.0
  %980 = vmatprep.subr.mxu0 0.0
  %981 = vmatpush1.msra.mxu0 0.0
  %982 = vmatprep.subr.mxu0 0.0
  %983 = vmatpush1.msra.mxu0 0.0
  %984 = vmatprep.subr.mxu0 0.0
  %985 = vmatpush1.msra.mxu0 0.0
  %986 = vmatprep.subr.mxu0 0.0
  %987 = vmatpush1.msra.mxu0 0.0
  %988 = vmatprep.subr.mxu0 0.0
  %989 = vmatpush1.msra.mxu0 0.0
  %990 = vmatprep.subr.mxu0 0.0
  %991 = vmatpush1.msra.mxu0 0.0
  %992 = vmatprep.subr.mxu0 0.0
  %993 = vmatpush1.msra.mxu0 0.0
  %994 = vmatprep.subr.mxu0 0.0
  %995 = vmatpush1.msra.mxu0 0.0
  %996 = vmatprep.subr.mxu0 0.0
  %997 = vmatpush1.msra.mxu0 0.0
  %998 = vmatprep.subr.mxu0 0.0
  %999 = vmatpush1.msra.mxu0 0.0
  %1000 = vmatprep.subr.mxu0 0.0
  %1001 = vmatpush1.msra.mxu0 0.0
  %1002 = vmatprep.subr.mxu0 0.0
  %1003 = vmatpush1.msra.mxu0 0.0
  %1004 = vmatprep.subr.mxu0 0.0
  %1005 = vmatpush1.msra.mxu0 0.0
  %1006 = vmatprep.subr.mxu0 0.0
  %1007 = vmatpush1.msra.mxu0 0.0
  %1008 = vmatprep.subr.mxu0 0.0
  %1009 = vmatpush1.msra.mxu0 0.0
  %1010 = vmatprep.subr.mxu0 0.0
  %1011 = vmatpush1.msra.mxu0 0.0
  %1012 = vmatprep.subr.mxu0 0.0
  %1013 = vmatpush1.msra.mxu0 0.0
  %1014 = vmatprep.subr.mxu0 0.0
  %1015 = vmatpush1.msra.mxu0 0.0
  %1016 = vmatprep.subr.mxu0 0.0
  %1017 = vmatpush1.msra.mxu0 0.0
  %1018 = vmatprep.subr.mxu0 0.0
  %1019 = vmatpush1.msra.mxu0 0.0
  %1020 = vmatprep.subr.mxu0 0.0
  %1021 = vmatpush1.msra.mxu0 0.0
  %1022 = vmatprep.subr.mxu0 0.0
  %1023 = vmatpush1.msra.mxu0 0.0
  %1024 = vmatprep.subr.mxu0 0.0
  %1025 = vmatpush1.msra.mxu0 0.0
  %1026 = vmatprep.mubr.f32.mxu0 0.0
  %1027 = vmatmul.mubr.f32.gmra.mrb[0].mxu0 %v957
  %v1028 = vpop.f32.mrb[0].mxu0
  %v1029 = vadd.f32 0.0, %v1028
  %v1030 = vpop.f32.mrb[0].mxu0
  %1031 = vmatprep.mubr.f32.mxu0 0.0
  %1032 = vmatmul.mubr.f32.gmra.mrb[0].mxu0 %v960
  %v1033 = vpop.f32.mrb[0].mxu0
  %v1034 = vadd.f32 0.0, %v1033
  %v1035 = vpop.f32.mrb[0].mxu0
  %1036 = vdwg.mxu0
  %v1037 = vadd.f32 %v162, %v1029
  %v1038 = vadd.f32 %v163, %v1034
  %v1039 = vld [vmem:[%s2 + $0x40] sm:$0xff]
  %v1040 = vld [vmem:[%s2 + $0x48] sm:$0xff]
  %v1041 = vld [vmem:[%s2 + $0x50] sm:$0xff]
  %v1042 = vld [vmem:[%s2 + $0x58] sm:$0xff]
  %v1043 = vld [vmem:[%s2 + $0x80] sm:$0x1]
  %v1044 = vlaneseq
  %v1045 = vshrl.u32 %v1044, 7
  %v1046 = vsub.s32 0, %v1045
  %v1047 = vrot.slane %v1043, %v1046
  %v1049 = vsel %vm122, %v1037, 0
  %v1052 = vsel %vm122, %v1038, 0
  %1054 = vmatprep.subr.mxu0 0.0
  %1055 = vmatpush1.msra.mxu0 %v1039
  %1056 = vmatprep.subr.mxu0 0.0
  %1057 = vmatpush1.msra.mxu0 %v1040
  %1058 = vmatprep.subr.mxu0 0.0
  %1059 = vmatpush1.msra.mxu0 %v1041
  %1060 = vmatprep.subr.mxu0 0.0
  %1061 = vmatpush1.msra.mxu0 %v1042
  %1062 = vmatprep.subr.mxu0 0.0
  %1063 = vmatpush1.msra.mxu0 0.0
  %1064 = vmatprep.subr.mxu0 0.0
  %1065 = vmatpush1.msra.mxu0 0.0
  %1066 = vmatprep.subr.mxu0 0.0
  %1067 = vmatpush1.msra.mxu0 0.0
  %1068 = vmatprep.subr.mxu0 0.0
  %1069 = vmatpush1.msra.mxu0 0.0
  %1070 = vmatprep.subr.mxu0 0.0
  %1071 = vmatpush1.msra.mxu0 0.0
  %1072 = vmatprep.subr.mxu0 0.0
  %1073 = vmatpush1.msra.mxu0 0.0
  %1074 = vmatprep.subr.mxu0 0.0
  %1075 = vmatpush1.msra.mxu0 0.0
  %1076 = vmatprep.subr.mxu0 0.0
  %1077 = vmatpush1.msra.mxu0 0.0
  %1078 = vmatprep.subr.mxu0 0.0
  %1079 = vmatpush1.msra.mxu0 0.0
  %1080 = vmatprep.subr.mxu0 0.0
  %1081 = vmatpush1.msra.mxu0 0.0
  %1082 = vmatprep.subr.mxu0 0.0
  %1083 = vmatpush1.msra.mxu0 0.0
  %1084 = vmatprep.subr.mxu0 0.0
  %1085 = vmatpush1.msra.mxu0 0.0
  %1086 = vmatprep.subr.mxu0 0.0
  %1087 = vmatpush1.msra.mxu0 0.0
  %1088 = vmatprep.subr.mxu0 0.0
  %1089 = vmatpush1.msra.mxu0 0.0
  %1090 = vmatprep.subr.mxu0 0.0
  %1091 = vmatpush1.msra.mxu0 0.0
  %1092 = vmatprep.subr.mxu0 0.0
  %1093 = vmatpush1.msra.mxu0 0.0
  %1094 = vmatprep.subr.mxu0 0.0
  %1095 = vmatpush1.msra.mxu0 0.0
  %1096 = vmatprep.subr.mxu0 0.0
  %1097 = vmatpush1.msra.mxu0 0.0
  %1098 = vmatprep.subr.mxu0 0.0
  %1099 = vmatpush1.msra.mxu0 0.0
  %1100 = vmatprep.subr.mxu0 0.0
  %1101 = vmatpush1.msra.mxu0 0.0
  %1102 = vmatprep.subr.mxu0 0.0
  %1103 = vmatpush1.msra.mxu0 0.0
  %1104 = vmatprep.subr.mxu0 0.0
  %1105 = vmatpush1.msra.mxu0 0.0
  %1106 = vmatprep.subr.mxu0 0.0
  %1107 = vmatpush1.msra.mxu0 0.0
  %1108 = vmatprep.subr.mxu0 0.0
  %1109 = vmatpush1.msra.mxu0 0.0
  %1110 = vmatprep.subr.mxu0 0.0
  %1111 = vmatpush1.msra.mxu0 0.0
  %1112 = vmatprep.subr.mxu0 0.0
  %1113 = vmatpush1.msra.mxu0 0.0
  %1114 = vmatprep.subr.mxu0 0.0
  %1115 = vmatpush1.msra.mxu0 0.0
  %1116 = vmatprep.subr.mxu0 0.0
  %1117 = vmatpush1.msra.mxu0 0.0
  %1118 = vmatprep.mubr.f32.mxu0 0.0
  %1119 = vmatmul.mubr.f32.gmra.mrb[0].mxu0 %v1049
  %v1120 = vpop.f32.mrb[0].mxu0
  %v1121 = vadd.f32 %v1047, %v1120
  %v1122 = vpop.f32.mrb[0].mxu0
  %1123 = vmatprep.mubr.f32.mxu0 0.0
  %1124 = vmatmul.mubr.f32.gmra.mrb[0].mxu0 %v1052
  %v1125 = vpop.f32.mrb[0].mxu0
  %v1126 = vadd.f32 %v1047, %v1125
  %v1127 = vpop.f32.mrb[0].mxu0
  %1128 = vdwg.mxu0
  %v1129 = vmul.f32 %v1121, 0.5
  %v1130 = vmul.f32 %v1126, 0.5
  %v1131 = vmul.f32 %v1121, 0.70710677
  %v1132 = vmul.f32 %v1126, 0.70710677
  %v1133 = verf.f32.pop %v1131
  %v1134 = verf.f32.pop %v1132
  %v1135 = vadd.f32 %v1133, 1.0
  %v1136 = vadd.f32 %v1134, 1.0
  %v1137 = vmul.f32 %v1129, %v1135
  %v1138 = vmul.f32 %v1130, %v1136
  %1139 = vrot.lane.b32.xlu0 %v1121, 64
  %v1140 = vpop.permute.xlu0 %1139
  %1141 = vrot.lane.b32.xlu0 %v1126, 64
  %v1142 = vpop.permute.xlu0 %1141
  %v1143 = vmul.f32 %v1137, %v1140
  %v1144 = vmul.f32 %v1138, %v1142
  %v1145 = vld [vmem:[%s1 + $0x168] sm:$0xff]
  %v1146 = vld [vmem:[%s1 + $0x170] sm:$0xff]
  %v1147 = vld [vmem:[%s1 + $0x178] sm:$0xff]
  %v1148 = vld [vmem:[%s1 + $0x180] sm:$0xff]
  %v1149 = vld [vmem:[%s1 + $0x188] sm:$0xff]
  %v1150 = vld [vmem:[%s1 + $0x190] sm:$0xff]
  %v1151 = vld [vmem:[%s1 + $0x198] sm:$0xff]
  %v1152 = vld [vmem:[%s1 + $0x1a0] sm:$0xff]
  %v1153 = vld [vmem:[%s1 + $0x1a8] sm:$0xff]
  %v1154 = vld [vmem:[%s1 + $0x1b0] sm:$0xff]
  %v1155 = vld [vmem:[%s1 + $0x1b8] sm:$0xff]
  %v1156 = vld [vmem:[%s1 + $0x1c0] sm:$0xff]
  %v1157 = vld [vmem:[%s1 + $0x1c8] sm:$0xff]
  %v1158 = vld [vmem:[%s1 + $0x1d0] sm:$0xff]
  %v1159 = vld [vmem:[%s1 + $0x1d8] sm:$0xff]
  %v1160 = vld [vmem:[%s1 + $0x1e0] sm:$0xff]
  %1161 = vmatprep.subr.mxu0 0.0
  %1162 = vmatpush1.msra.mxu0 %v1145
  %1163 = vmatprep.subr.mxu0 0.0
  %1164 = vmatpush1.msra.mxu0 %v1146
  %1165 = vmatprep.subr.mxu0 0.0
  %1166 = vmatpush1.msra.mxu0 %v1147
  %1167 = vmatprep.subr.mxu0 0.0
  %1168 = vmatpush1.msra.mxu0 %v1148
  %1169 = vmatprep.subr.mxu0 0.0
  %1170 = vmatpush1.msra.mxu0 %v1149
  %1171 = vmatprep.subr.mxu0 0.0
  %1172 = vmatpush1.msra.mxu0 %v1150
  %1173 = vmatprep.subr.mxu0 0.0
  %1174 = vmatpush1.msra.mxu0 %v1151
  %1175 = vmatprep.subr.mxu0 0.0
  %1176 = vmatpush1.msra.mxu0 %v1152
  %1177 = vmatprep.subr.mxu0 0.0
  %1178 = vmatpush1.msra.mxu0 %v1153
  %1179 = vmatprep.subr.mxu0 0.0
  %1180 = vmatpush1.msra.mxu0 %v1154
  %1181 = vmatprep.subr.mxu0 0.0
  %1182 = vmatpush1.msra.mxu0 %v1155
  %1183 = vmatprep.subr.mxu0 0.0
  %1184 = vmatpush1.msra.mxu0 %v1156
  %1185 = vmatprep.subr.mxu0 0.0
  %1186 = vmatpush1.msra.mxu0 %v1157
  %1187 = vmatprep.subr.mxu0 0.0
  %1188 = vmatpush1.msra.mxu0 %v1158
  %1189 = vmatprep.subr.mxu0 0.0
  %1190 = vmatpush1.msra.mxu0 %v1159
  %1191 = vmatprep.subr.mxu0 0.0
  %1192 = vmatpush1.msra.mxu0 %v1160
  %1193 = vmatprep.subr.mxu0 0.0
  %1194 = vmatpush1.msra.mxu0 0.0
  %1195 = vmatprep.subr.mxu0 0.0
  %1196 = vmatpush1.msra.mxu0 0.0
  %1197 = vmatprep.subr.mxu0 0.0
  %1198 = vmatpush1.msra.mxu0 0.0
  %1199 = vmatprep.subr.mxu0 0.0
  %1200 = vmatpush1.msra.mxu0 0.0
  %1201 = vmatprep.subr.mxu0 0.0
  %1202 = vmatpush1.msra.mxu0 0.0
  %1203 = vmatprep.subr.mxu0 0.0
  %1204 = vmatpush1.msra.mxu0 0.0
  %1205 = vmatprep.subr.mxu0 0.0
  %1206 = vmatpush1.msra.mxu0 0.0
  %1207 = vmatprep.subr.mxu0 0.0
  %1208 = vmatpush1.msra.mxu0 0.0
  %1209 = vmatprep.subr.mxu0 0.0
  %1210 = vmatpush1.msra.mxu0 0.0
  %1211 = vmatprep.subr.mxu0 0.0
  %1212 = vmatpush1.msra.mxu0 0.0
  %1213 = vmatprep.subr.mxu0 0.0
  %1214 = vmatpush1.msra.mxu0 0.0
  %1215 = vmatprep.subr.mxu0 0.0
  %1216 = vmatpush1.msra.mxu0 0.0
  %1217 = vmatprep.subr.mxu0 0.0
  %1218 = vmatpush1.msra.mxu0 0.0
  %1219 = vmatprep.subr.mxu0 0.0
  %1220 = vmatpush1.msra.mxu0 0.0
  %1221 = vmatprep.subr.mxu0 0.0
  %1222 = vmatpush1.msra.mxu0 0.0
  %1223 = vmatprep.subr.mxu0 0.0
  %1224 = vmatpush1.msra.mxu0 0.0
  %1225 = vmatprep.mubr.f32.mxu0 0.0
  %1226 = vmatmul.mubr.f32.gmra.mrb[0].mxu0 %v1143
  %v1227 = vpop.f32.mrb[0].mxu0
  %v1228 = vadd.f32 0.0, %v1227
  %v1229 = vpop.f32.mrb[0].mxu0
  %1230 = vmatprep.mubr.f32.mxu0 0.0
  %1231 = vmatmul.mubr.f32.gmra.mrb[0].mxu0 %v1144
  %v1232 = vpop.f32.mrb[0].mxu0
  %v1233 = vadd.f32 0.0, %v1232
  %v1234 = vpop.f32.mrb[0].mxu0
  %1235 = vdwg.mxu0
  %v1236 = vadd.f32 %v1037, %v1228
  %v1237 = vadd.f32 %v1038, %v1233
  %v1238 = vld [vmem:[%s1 + $0x268] sm:$0x1]
  %v1239 = vlaneseq
  %v1240 = vshrl.u32 %v1239, 7
  %v1241 = vsub.s32 0, %v1240
  %v1242 = vrot.slane %v1238, %v1241
  %v1243 = vadd.f32 %v1236, %v1242
  %v1244 = vadd.f32 %v1237, %v1242
  %v1245 = vld [vmem:[%s2 + $0x20] sm:$0xff]
  %v1246 = vld [vmem:[%s2 + $0x28] sm:$0xff]
  %v1247 = vld [vmem:[%s2 + $0x30] sm:$0xff]
  %v1248 = vld [vmem:[%s2 + $0x38] sm:$0xff]
  %v1250 = vsel %vm122, %v1243, 0
  %v1253 = vsel %vm122, %v1244, 0
  %1255 = vmatprep.subr.mxu0 0.0
  %1256 = vmatpush1.msra.mxu0 %v1245
  %1257 = vmatprep.subr.mxu0 0.0
  %1258 = vmatpush1.msra.mxu0 %v1246
  %1259 = vmatprep.subr.mxu0 0.0
  %1260 = vmatpush1.msra.mxu0 %v1247
  %1261 = vmatprep.subr.mxu0 0.0
  %1262 = vmatpush1.msra.mxu0 %v1248
  %1263 = vmatprep.subr.mxu0 0.0
  %1264 = vmatpush1.msra.mxu0 0.0
  %1265 = vmatprep.subr.mxu0 0.0
  %1266 = vmatpush1.msra.mxu0 0.0
  %1267 = vmatprep.subr.mxu0 0.0
  %1268 = vmatpush1.msra.mxu0 0.0
  %1269 = vmatprep.subr.mxu0 0.0
  %1270 = vmatpush1.msra.mxu0 0.0
  %1271 = vmatprep.subr.mxu0 0.0
  %1272 = vmatpush1.msra.mxu0 0.0
  %1273 = vmatprep.subr.mxu0 0.0
  %1274 = vmatpush1.msra.mxu0 0.0
  %1275 = vmatprep.subr.mxu0 0.0
  %1276 = vmatpush1.msra.mxu0 0.0
  %1277 = vmatprep.subr.mxu0 0.0
  %1278 = vmatpush1.msra.mxu0 0.0
  %1279 = vmatprep.subr.mxu0 0.0
  %1280 = vmatpush1.msra.mxu0 0.0
  %1281 = vmatprep.subr.mxu0 0.0
  %1282 = vmatpush1.msra.mxu0 0.0
  %1283 = vmatprep.subr.mxu0 0.0
  %1284 = vmatpush1.msra.mxu0 0.0
  %1285 = vmatprep.subr.mxu0 0.0
  %1286 = vmatpush1.msra.mxu0 0.0
  %1287 = vmatprep.subr.mxu0 0.0
  %1288 = vmatpush1.msra.mxu0 0.0
  %1289 = vmatprep.subr.mxu0 0.0
  %1290 = vmatpush1.msra.mxu0 0.0
  %1291 = vmatprep.subr.mxu0 0.0
  %1292 = vmatpush1.msra.mxu0 0.0
  %1293 = vmatprep.subr.mxu0 0.0
  %1294 = vmatpush1.msra.mxu0 0.0
  %1295 = vmatprep.subr.mxu0 0.0
  %1296 = vmatpush1.msra.mxu0 0.0
  %1297 = vmatprep.subr.mxu0 0.0
  %1298 = vmatpush1.msra.mxu0 0.0
  %1299 = vmatprep.subr.mxu0 0.0
  %1300 = vmatpush1.msra.mxu0 0.0
  %1301 = vmatprep.subr.mxu0 0.0
  %1302 = vmatpush1.msra.mxu0 0.0
  %1303 = vmatprep.subr.mxu0 0.0
  %1304 = vmatpush1.msra.mxu0 0.0
  %1305 = vmatprep.subr.mxu0 0.0
  %1306 = vmatpush1.msra.mxu0 0.0
  %1307 = vmatprep.subr.mxu0 0.0
  %1308 = vmatpush1.msra.mxu0 0.0
  %1309 = vmatprep.subr.mxu0 0.0
  %1310 = vmatpush1.msra.mxu0 0.0
  %1311 = vmatprep.subr.mxu0 0.0
  %1312 = vmatpush1.msra.mxu0 0.0
  %1313 = vmatprep.subr.mxu0 0.0
  %1314 = vmatpush1.msra.mxu0 0.0
  %1315 = vmatprep.subr.mxu0 0.0
  %1316 = vmatpush1.msra.mxu0 0.0
  %1317 = vmatprep.subr.mxu0 0.0
  %1318 = vmatpush1.msra.mxu0 0.0
  %1319 = vmatprep.mubr.f32.mxu0 0.0
  %1320 = vmatmul.mubr.f32.gmra.mrb[0].mxu0 %v1250
  %v1321 = vpop.f32.mrb[0].mxu0
  %v1322 = vadd.f32 0.0, %v1321
  %v1323 = vpop.f32.mrb[0].mxu0
  %1324 = vmatprep.mubr.f32.mxu0 0.0
  %1325 = vmatmul.mubr.f32.gmra.mrb[0].mxu0 %v1253
  %v1326 = vpop.f32.mrb[0].mxu0
  %v1327 = vadd.f32 0.0, %v1326
  %v1328 = vpop.f32.mrb[0].mxu0
  %1329 = vdwg.mxu0
  %1332 = vrot.lane.b32.xlu0 %v1322, 96
  %v1333 = vpop.permute.xlu0 %1332
  %1334 = vrot.lane.b32.xlu0 %v1327, 96
  %v1335 = vpop.permute.xlu0 %1334
  %1338 = vmatprep.subr.mxu0 0.0
  %1339 = vmatpush1.msra.mxu0 %v1333
  %1340 = vmatprep.subr.mxu0 0.0
  %1341 = vmatpush1.msra.mxu0 %v1335
  %1342 = vmatprep.subr.mxu0 0.0
  %1343 = vmatpush1.msra.mxu0 0.0
  %1344 = vmatprep.subr.mxu0 0.0
  %1345 = vmatpush1.msra.mxu0 0.0
  %1346 = vmatprep.subr.mxu0 0.0
  %1347 = vmatpush1.msra.mxu0 0.0
  %1348 = vmatprep.subr.mxu0 0.0
  %1349 = vmatpush1.msra.mxu0 0.0
  %1350 = vmatprep.subr.mxu0 0.0
  %1351 = vmatpush1.msra.mxu0 0.0
  %1352 = vmatprep.subr.mxu0 0.0
  %1353 = vmatpush1.msra.mxu0 0.0
  %1354 = vmatprep.subr.mxu0 0.0
  %1355 = vmatpush1.msra.mxu0 0.0
  %1356 = vmatprep.subr.mxu0 0.0
  %1357 = vmatpush1.msra.mxu0 0.0
  %1358 = vmatprep.subr.mxu0 0.0
  %1359 = vmatpush1.msra.mxu0 0.0
  %1360 = vmatprep.subr.mxu0 0.0
  %1361 = vmatpush1.msra.mxu0 0.0
  %1362 = vmatprep.subr.mxu0 0.0
  %1363 = vmatpush1.msra.mxu0 0.0
  %1364 = vmatprep.subr.mxu0 0.0
  %1365 = vmatpush1.msra.mxu0 0.0
  %1366 = vmatprep.subr.mxu0 0.0
  %1367 = vmatpush1.msra.mxu0 0.0
  %1368 = vmatprep.subr.mxu0 0.0
  %1369 = vmatpush1.msra.mxu0 0.0
  %1370 = vmatprep.subr.mxu0 0.0
  %1371 = vmatpush1.msra.mxu0 0.0
  %1372 = vmatprep.subr.mxu0 0.0
  %1373 = vmatpush1.msra.mxu0 0.0
  %1374 = vmatprep.subr.mxu0 0.0
  %1375 = vmatpush1.msra.mxu0 0.0
  %1376 = vmatprep.subr.mxu0 0.0
  %1377 = vmatpush1.msra.mxu0 0.0
  %1378 = vmatprep.subr.mxu0 0.0
  %1379 = vmatpush1.msra.mxu0 0.0
  %1380 = vmatprep.subr.mxu0 0.0
  %1381 = vmatpush1.msra.mxu0 0.0
  %1382 = vmatprep.subr.mxu0 0.0
  %1383 = vmatpush1.msra.mxu0 0.0
  %1384 = vmatprep.subr.mxu0 0.0
  %1385 = vmatpush1.msra.mxu0 0.0
  %1386 = vmatprep.subr.mxu0 0.0
  %1387 = vmatpush1.msra.mxu0 0.0
  %1388 = vmatprep.subr.mxu0 0.0
  %1389 = vmatpush1.msra.mxu0 0.0
  %1390 = vmatprep.subr.mxu0 0.0
  %1391 = vmatpush1.msra.mxu0 0.0
  %1392 = vmatprep.subr.mxu0 0.0
  %1393 = vmatpush1.msra.mxu0 0.0
  %1394 = vmatprep.subr.mxu0 0.0
  %1395 = vmatpush1.msra.mxu0 0.0
  %1396 = vmatprep.subr.mxu0 0.0
  %1397 = vmatpush1.msra.mxu0 0.0
  %1398 = vmatprep.subr.mxu0 0.0
  %1399 = vmatpush1.msra.mxu0 0.0
  %1400 = vmatprep.subr.mxu0 0.0
  %1401 = vmatpush1.msra.mxu0 0.0
  %1402 = vmatprep.mubr.f32.mxu0 0.0
  %1403 = vmatmul.mubr.f32.gmra.mrb[0].mxu0 %v260
  %v1404 = vpop.f32.mrb[0].mxu0
  %v1405 = vadd.f32 0.0, %v1404
  %v1406 = vpop.f32.mrb[0].mxu0
  %1407 = vdwg.mxu0
  %v1409 = vsel %vm122, %v1405, 0
  %1411 = vmatprep.subr.mxu0 0.0
  %1412 = vmatpush1.xpose.msra.mxu0 %v1409
  %1413 = vmatprep.subr.mxu0 0.0
  %1414 = vmatpush1.xpose.msra.mxu0 0.0
  %1415 = vmatprep.subr.mxu0 0.0
  %1416 = vmatpush1.xpose.msra.mxu0 0.0
  %1417 = vmatprep.subr.mxu0 0.0
  %1418 = vmatpush1.xpose.msra.mxu0 0.0
  %1419 = vmatprep.subr.mxu0 0.0
  %1420 = vmatpush1.xpose.msra.mxu0 0.0
  %1421 = vmatprep.subr.mxu0 0.0
  %1422 = vmatpush1.xpose.msra.mxu0 0.0
  %1423 = vmatprep.subr.mxu0 0.0
  %1424 = vmatpush1.xpose.msra.mxu0 0.0
  %1425 = vmatprep.subr.mxu0 0.0
  %1426 = vmatpush1.xpose.msra.mxu0 0.0
  %1427 = vmatprep.subr.mxu0 0.0
  %1428 = vmatpush1.xpose.msra.mxu0 0.0
  %1429 = vmatprep.subr.mxu0 0.0
  %1430 = vmatpush1.xpose.msra.mxu0 0.0
  %1431 = vmatprep.subr.mxu0 0.0
  %1432 = vmatpush1.xpose.msra.mxu0 0.0
  %1433 = vmatprep.subr.mxu0 0.0
  %1434 = vmatpush1.xpose.msra.mxu0 0.0
  %1435 = vmatprep.subr.mxu0 0.0
  %1436 = vmatpush1.xpose.msra.mxu0 0.0
  %1437 = vmatprep.subr.mxu0 0.0
  %1438 = vmatpush1.xpose.msra.mxu0 0.0
  %1439 = vmatprep.subr.mxu0 0.0
  %1440 = vmatpush1.xpose.msra.mxu0 0.0
  %1441 = vmatprep.subr.mxu0 0.0
  %1442 = vmatpush1.xpose.msra.mxu0 0.0
  %1443 = vmatprep.subr.mxu0 0.0
  %1444 = vmatpush1.xpose.msra.mxu0 0.0
  %1445 = vmatprep.subr.mxu0 0.0
  %1446 = vmatpush1.xpose.msra.mxu0 0.0
  %1447 = vmatprep.subr.mxu0 0.0
  %1448 = vmatpush1.xpose.msra.mxu0 0.0
  %1449 = vmatprep.subr.mxu0 0.0
  %1450 = vmatpush1.xpose.msra.mxu0 0.0
  %1451 = vmatprep.subr.mxu0 0.0
  %1452 = vmatpush1.xpose.msra.mxu0 0.0
  %1453 = vmatprep.subr.mxu0 0.0
  %1454 = vmatpush1.xpose.msra.mxu0 0.0
  %1455 = vmatprep.subr.mxu0 0.0
  %1456 = vmatpush1.xpose.msra.mxu0 0.0
  %1457 = vmatprep.subr.mxu0 0.0
  %1458 = vmatpush1.xpose.msra.mxu0 0.0
  %1459 = vmatprep.subr.mxu0 0.0
  %1460 = vmatpush1.xpose.msra.mxu0 0.0
  %1461 = vmatprep.subr.mxu0 0.0
  %1462 = vmatpush1.xpose.msra.mxu0 0.0
  %1463 = vmatprep.subr.mxu0 0.0
  %1464 = vmatpush1.xpose.msra.mxu0 0.0
  %1465 = vmatprep.subr.mxu0 0.0
  %1466 = vmatpush1.xpose.msra.mxu0 0.0
  %1467 = vmatprep.subr.mxu0 0.0
  %1468 = vmatpush1.xpose.msra.mxu0 0.0
  %1469 = vmatprep.subr.mxu0 0.0
  %1470 = vmatpush1.xpose.msra.mxu0 0.0
  %1471 = vmatprep.subr.mxu0 0.0
  %1472 = vmatpush1.xpose.msra.mxu0 0.0
  %1473 = vmatprep.subr.mxu0 0.0
  %1474 = vmatpush1.xpose.msra.mxu0 0.0
  %1475 = vmatprep.mubr.f32.mxu0 0.0
  %1476 = vmatmul.mubr.f32.gmra.mrb[0].mxu0 %v341
  %v1477 = vpop.f32.mrb[0].mxu0
  %v1478 = vadd.f32 0.0, %v1477
  %v1479 = vpop.f32.mrb[0].mxu0
  %1480 = vmatprep.mubr.f32.mxu0 0.0
  %1481 = vmatmul.mubr.f32.gmra.mrb[0].mxu0 %v344
  %v1482 = vpop.f32.mrb[0].mxu0
  %v1483 = vadd.f32 0.0, %v1482
  %v1484 = vpop.f32.mrb[0].mxu0
  %1485 = vmatprep.mubr.f32.mxu0 0.0
  %1486 = vmatmul.mubr.f32.gmra.mrb[0].mxu0 %v347
  %v1487 = vpop.f32.mrb[0].mxu0
  %v1488 = vadd.f32 0.0, %v1487
  %v1489 = vpop.f32.mrb[0].mxu0
  %1490 = vmatprep.mubr.f32.mxu0 0.0
  %1491 = vmatmul.mubr.f32.gmra.mrb[0].mxu0 %v350
  %v1492 = vpop.f32.mrb[0].mxu0
  %v1493 = vadd.f32 0.0, %v1492
  %v1494 = vpop.f32.mrb[0].mxu0
  %1495 = vdwg.mxu0
  %v1496 = vmul.f32 %v1478, %v332
  %v1497 = vmul.f32 %v1483, %v333
  %v1498 = vmul.f32 %v1488, %v334
  %v1499 = vmul.f32 %v1493, %v335
  %1500 = vmatprep.subr.mxu0 0.0
  %1501 = vmatpush1.xpose.msra.mxu0 %v1409
  %1502 = vmatprep.subr.mxu0 0.0
  %1503 = vmatpush1.xpose.msra.mxu0 0.0
  %1504 = vmatprep.subr.mxu0 0.0
  %1505 = vmatpush1.xpose.msra.mxu0 0.0
  %1506 = vmatprep.subr.mxu0 0.0
  %1507 = vmatpush1.xpose.msra.mxu0 0.0
  %1508 = vmatprep.subr.mxu0 0.0
  %1509 = vmatpush1.xpose.msra.mxu0 0.0
  %1510 = vmatprep.subr.mxu0 0.0
  %1511 = vmatpush1.xpose.msra.mxu0 0.0
  %1512 = vmatprep.subr.mxu0 0.0
  %1513 = vmatpush1.xpose.msra.mxu0 0.0
  %1514 = vmatprep.subr.mxu0 0.0
  %1515 = vmatpush1.xpose.msra.mxu0 0.0
  %1516 = vmatprep.subr.mxu0 0.0
  %1517 = vmatpush1.xpose.msra.mxu0 0.0
  %1518 = vmatprep.subr.mxu0 0.0
  %1519 = vmatpush1.xpose.msra.mxu0 0.0
  %1520 = vmatprep.subr.mxu0 0.0
  %1521 = vmatpush1.xpose.msra.mxu0 0.0
  %1522 = vmatprep.subr.mxu0 0.0
  %1523 = vmatpush1.xpose.msra.mxu0 0.0
  %1524 = vmatprep.subr.mxu0 0.0
  %1525 = vmatpush1.xpose.msra.mxu0 0.0
  %1526 = vmatprep.subr.mxu0 0.0
  %1527 = vmatpush1.xpose.msra.mxu0 0.0
  %1528 = vmatprep.subr.mxu0 0.0
  %1529 = vmatpush1.xpose.msra.mxu0 0.0
  %1530 = vmatprep.subr.mxu0 0.0
  %1531 = vmatpush1.xpose.msra.mxu0 0.0
  %1532 = vmatprep.subr.mxu0 0.0
  %1533 = vmatpush1.xpose.msra.mxu0 0.0
  %1534 = vmatprep.subr.mxu0 0.0
  %1535 = vmatpush1.xpose.msra.mxu0 0.0
  %1536 = vmatprep.subr.mxu0 0.0
  %1537 = vmatpush1.xpose.msra.mxu0 0.0
  %1538 = vmatprep.subr.mxu0 0.0
  %1539 = vmatpush1.xpose.msra.mxu0 0.0
  %1540 = vmatprep.subr.mxu0 0.0
  %1541 = vmatpush1.xpose.msra.mxu0 0.0
  %1542 = vmatprep.subr.mxu0 0.0
  %1543 = vmatpush1.xpose.msra.mxu0 0.0
  %1544 = vmatprep.subr.mxu0 0.0
  %1545 = vmatpush1.xpose.msra.mxu0 0.0
  %1546 = vmatprep.subr.mxu0 0.0
  %1547 = vmatpush1.xpose.msra.mxu0 0.0
  %1548 = vmatprep.subr.mxu0 0.0
  %1549 = vmatpush1.xpose.msra.mxu0 0.0
  %1550 = vmatprep.subr.mxu0 0.0
  %1551 = vmatpush1.xpose.msra.mxu0 0.0
  %1552 = vmatprep.subr.mxu0 0.0
  %1553 = vmatpush1.xpose.msra.mxu0 0.0
  %1554 = vmatprep.subr.mxu0 0.0
  %1555 = vmatpush1.xpose.msra.mxu0 0.0
  %1556 = vmatprep.subr.mxu0 0.0
  %1557 = vmatpush1.xpose.msra.mxu0 0.0
  %1558 = vmatprep.subr.mxu0 0.0
  %1559 = vmatpush1.xpose.msra.mxu0 0.0
  %1560 = vmatprep.subr.mxu0 0.0
  %1561 = vmatpush1.xpose.msra.mxu0 0.0
  %1562 = vmatprep.subr.mxu0 0.0
  %1563 = vmatpush1.xpose.msra.mxu0 0.0
  %1564 = vmatprep.mubr.f32.mxu0 0.0
  %1565 = vmatmul.mubr.f32.gmra.mrb[0].mxu0 %v449
  %v1566 = vpop.f32.mrb[0].mxu0
  %v1567 = vadd.f32 0.0, %v1566
  %v1568 = vpop.f32.mrb[0].mxu0
  %1569 = vmatprep.mubr.f32.mxu0 0.0
  %1570 = vmatmul.mubr.f32.gmra.mrb[0].mxu0 %v452
  %v1571 = vpop.f32.mrb[0].mxu0
  %v1572 = vadd.f32 0.0, %v1571
  %v1573 = vpop.f32.mrb[0].mxu0
  %1574 = vmatprep.mubr.f32.mxu0 0.0
  %1575 = vmatmul.mubr.f32.gmra.mrb[0].mxu0 %v455
  %v1576 = vpop.f32.mrb[0].mxu0
  %v1577 = vadd.f32 0.0, %v1576
  %v1578 = vpop.f32.mrb[0].mxu0
  %1579 = vmatprep.mubr.f32.mxu0 0.0
  %1580 = vmatmul.mubr.f32.gmra.mrb[0].mxu0 %v458
  %v1581 = vpop.f32.mrb[0].mxu0
  %v1582 = vadd.f32 0.0, %v1581
  %v1583 = vpop.f32.mrb[0].mxu0
  %1584 = vdwg.mxu0
  %v1585 = vmul.f32 %v1567, %v332
  %v1586 = vmul.f32 %v1572, %v333
  %v1587 = vmul.f32 %v1577, %v334
  %v1588 = vmul.f32 %v1582, %v335
  %v1590 = vsel %vm551, %v1585, 0
  %v1593 = vsel %vm551, %v1586, 0
  %v1596 = vsel %vm551, %v1587, 0
  %v1599 = vsel %vm551, %v1588, 0
  %1601 = vmatprep.subr.mxu0 0.0
  %1602 = vmatpush1.msra.mxu0 %v550
  %1603 = vmatprep.subr.mxu0 0.0
  %1604 = vmatpush1.msra.mxu0 0.0
  %1605 = vmatprep.subr.mxu0 0.0
  %1606 = vmatpush1.msra.mxu0 0.0
  %1607 = vmatprep.subr.mxu0 0.0
  %1608 = vmatpush1.msra.mxu0 0.0
  %1609 = vmatprep.subr.mxu0 0.0
  %1610 = vmatpush1.msra.mxu0 0.0
  %1611 = vmatprep.subr.mxu0 0.0
  %1612 = vmatpush1.msra.mxu0 0.0
  %1613 = vmatprep.subr.mxu0 0.0
  %1614 = vmatpush1.msra.mxu0 0.0
  %1615 = vmatprep.subr.mxu0 0.0
  %1616 = vmatpush1.msra.mxu0 0.0
  %1617 = vmatprep.subr.mxu0 0.0
  %1618 = vmatpush1.msra.mxu0 0.0
  %1619 = vmatprep.subr.mxu0 0.0
  %1620 = vmatpush1.msra.mxu0 0.0
  %1621 = vmatprep.subr.mxu0 0.0
  %1622 = vmatpush1.msra.mxu0 0.0
  %1623 = vmatprep.subr.mxu0 0.0
  %1624 = vmatpush1.msra.mxu0 0.0
  %1625 = vmatprep.subr.mxu0 0.0
  %1626 = vmatpush1.msra.mxu0 0.0
  %1627 = vmatprep.subr.mxu0 0.0
  %1628 = vmatpush1.msra.mxu0 0.0
  %1629 = vmatprep.subr.mxu0 0.0
  %1630 = vmatpush1.msra.mxu0 0.0
  %1631 = vmatprep.subr.mxu0 0.0
  %1632 = vmatpush1.msra.mxu0 0.0
  %1633 = vmatprep.subr.mxu0 0.0
  %1634 = vmatpush1.msra.mxu0 0.0
  %1635 = vmatprep.subr.mxu0 0.0
  %1636 = vmatpush1.msra.mxu0 0.0
  %1637 = vmatprep.subr.mxu0 0.0
  %1638 = vmatpush1.msra.mxu0 0.0
  %1639 = vmatprep.subr.mxu0 0.0
  %1640 = vmatpush1.msra.mxu0 0.0
  %1641 = vmatprep.subr.mxu0 0.0
  %1642 = vmatpush1.msra.mxu0 0.0
  %1643 = vmatprep.subr.mxu0 0.0
  %1644 = vmatpush1.msra.mxu0 0.0
  %1645 = vmatprep.subr.mxu0 0.0
  %1646 = vmatpush1.msra.mxu0 0.0
  %1647 = vmatprep.subr.mxu0 0.0
  %1648 = vmatpush1.msra.mxu0 0.0
  %1649 = vmatprep.subr.mxu0 0.0
  %1650 = vmatpush1.msra.mxu0 0.0
  %1651 = vmatprep.subr.mxu0 0.0
  %1652 = vmatpush1.msra.mxu0 0.0
  %1653 = vmatprep.subr.mxu0 0.0
  %1654 = vmatpush1.msra.mxu0 0.0
  %1655 = vmatprep.subr.mxu0 0.0
  %1656 = vmatpush1.msra.mxu0 0.0
  %1657 = vmatprep.subr.mxu0 0.0
  %1658 = vmatpush1.msra.mxu0 0.0
  %1659 = vmatprep.subr.mxu0 0.0
  %1660 = vmatpush1.msra.mxu0 0.0
  %1661 = vmatprep.subr.mxu0 0.0
  %1662 = vmatpush1.msra.mxu0 0.0
  %1663 = vmatprep.subr.mxu0 0.0
  %1664 = vmatpush1.msra.mxu0 0.0
  %1665 = vmatprep.mubr.f32.mxu0 0.0
  %1666 = vmatmul.mubr.f32.gmra.mrb[0].mxu0 %v1590
  %v1667 = vpop.f32.mrb[0].mxu0
  %v1668 = vadd.f32 0.0, %v1667
  %v1669 = vpop.f32.mrb[0].mxu0
  %1670 = vmatprep.mubr.f32.mxu0 0.0
  %1671 = vmatmul.mubr.f32.gmra.mrb[0].mxu0 %v1593
  %v1672 = vpop.f32.mrb[0].mxu0
  %v1673 = vadd.f32 0.0, %v1672
  %v1674 = vpop.f32.mrb[0].mxu0
  %1675 = vmatprep.mubr.f32.mxu0 0.0
  %1676 = vmatmul.mubr.f32.gmra.mrb[0].mxu0 %v1596
  %v1677 = vpop.f32.mrb[0].mxu0
  %v1678 = vadd.f32 0.0, %v1677
  %v1679 = vpop.f32.mrb[0].mxu0
  %1680 = vmatprep.mubr.f32.mxu0 0.0
  %1681 = vmatmul.mubr.f32.gmra.mrb[0].mxu0 %v1599
  %v1682 = vpop.f32.mrb[0].mxu0
  %v1683 = vadd.f32 0.0, %v1682
  %v1684 = vpop.f32.mrb[0].mxu0
  %1685 = vdwg.mxu0
  %v1687 = vsel %vm551, %v1496, 0
  %v1690 = vsel %vm551, %v1497, 0
  %v1693 = vsel %vm551, %v1498, 0
  %v1696 = vsel %vm551, %v1499, 0
  %1698 = vmatprep.subr.mxu0 0.0
  %1699 = vmatpush1.msra.mxu0 %v549
  %1700 = vmatprep.subr.mxu0 0.0
  %1701 = vmatpush1.msra.mxu0 0.0
  %1702 = vmatprep.subr.mxu0 0.0
  %1703 = vmatpush1.msra.mxu0 0.0
  %1704 = vmatprep.subr.mxu0 0.0
  %1705 = vmatpush1.msra.mxu0 0.0
  %1706 = vmatprep.subr.mxu0 0.0
  %1707 = vmatpush1.msra.mxu0 0.0
  %1708 = vmatprep.subr.mxu0 0.0
  %1709 = vmatpush1.msra.mxu0 0.0
  %1710 = vmatprep.subr.mxu0 0.0
  %1711 = vmatpush1.msra.mxu0 0.0
  %1712 = vmatprep.subr.mxu0 0.0
  %1713 = vmatpush1.msra.mxu0 0.0
  %1714 = vmatprep.subr.mxu0 0.0
  %1715 = vmatpush1.msra.mxu0 0.0
  %1716 = vmatprep.subr.mxu0 0.0
  %1717 = vmatpush1.msra.mxu0 0.0
  %1718 = vmatprep.subr.mxu0 0.0
  %1719 = vmatpush1.msra.mxu0 0.0
  %1720 = vmatprep.subr.mxu0 0.0
  %1721 = vmatpush1.msra.mxu0 0.0
  %1722 = vmatprep.subr.mxu0 0.0
  %1723 = vmatpush1.msra.mxu0 0.0
  %1724 = vmatprep.subr.mxu0 0.0
  %1725 = vmatpush1.msra.mxu0 0.0
  %1726 = vmatprep.subr.mxu0 0.0
  %1727 = vmatpush1.msra.mxu0 0.0
  %1728 = vmatprep.subr.mxu0 0.0
  %1729 = vmatpush1.msra.mxu0 0.0
  %1730 = vmatprep.subr.mxu0 0.0
  %1731 = vmatpush1.msra.mxu0 0.0
  %1732 = vmatprep.subr.mxu0 0.0
  %1733 = vmatpush1.msra.mxu0 0.0
  %1734 = vmatprep.subr.mxu0 0.0
  %1735 = vmatpush1.msra.mxu0 0.0
  %1736 = vmatprep.subr.mxu0 0.0
  %1737 = vmatpush1.msra.mxu0 0.0
  %1738 = vmatprep.subr.mxu0 0.0
  %1739 = vmatpush1.msra.mxu0 0.0
  %1740 = vmatprep.subr.mxu0 0.0
  %1741 = vmatpush1.msra.mxu0 0.0
  %1742 = vmatprep.subr.mxu0 0.0
  %1743 = vmatpush1.msra.mxu0 0.0
  %1744 = vmatprep.subr.mxu0 0.0
  %1745 = vmatpush1.msra.mxu0 0.0
  %1746 = vmatprep.subr.mxu0 0.0
  %1747 = vmatpush1.msra.mxu0 0.0
  %1748 = vmatprep.subr.mxu0 0.0
  %1749 = vmatpush1.msra.mxu0 0.0
  %1750 = vmatprep.subr.mxu0 0.0
  %1751 = vmatpush1.msra.mxu0 0.0
  %1752 = vmatprep.subr.mxu0 0.0
  %1753 = vmatpush1.msra.mxu0 0.0
  %1754 = vmatprep.subr.mxu0 0.0
  %1755 = vmatpush1.msra.mxu0 0.0
  %1756 = vmatprep.subr.mxu0 0.0
  %1757 = vmatpush1.msra.mxu0 0.0
  %1758 = vmatprep.subr.mxu0 0.0
  %1759 = vmatpush1.msra.mxu0 0.0
  %1760 = vmatprep.subr.mxu0 0.0
  %1761 = vmatpush1.msra.mxu0 0.0
  %1762 = vmatprep.mubr.f32.mxu0 0.0
  %1763 = vmatmul.mubr.f32.gmra.mrb[0].mxu0 %v1687
  %v1764 = vpop.f32.mrb[0].mxu0
  %v1765 = vadd.f32 %v1668, %v1764
  %v1766 = vpop.f32.mrb[0].mxu0
  %1767 = vmatprep.mubr.f32.mxu0 0.0
  %1768 = vmatmul.mubr.f32.gmra.mrb[0].mxu0 %v1690
  %v1769 = vpop.f32.mrb[0].mxu0
  %v1770 = vadd.f32 %v1673, %v1769
  %v1771 = vpop.f32.mrb[0].mxu0
  %1772 = vmatprep.mubr.f32.mxu0 0.0
  %1773 = vmatmul.mubr.f32.gmra.mrb[0].mxu0 %v1693
  %v1774 = vpop.f32.mrb[0].mxu0
  %v1775 = vadd.f32 %v1678, %v1774
  %v1776 = vpop.f32.mrb[0].mxu0
  %1777 = vmatprep.mubr.f32.mxu0 0.0
  %1778 = vmatmul.mubr.f32.gmra.mrb[0].mxu0 %v1696
  %v1779 = vpop.f32.mrb[0].mxu0
  %v1780 = vadd.f32 %v1683, %v1779
  %v1781 = vpop.f32.mrb[0].mxu0
  %1782 = vdwg.mxu0
  %v1783 = vmul.f32 %v1765, %v746
  %v1784 = vmul.f32 %v1770, %v747
  %v1785 = vmul.f32 %v1775, %v748
  %v1786 = vmul.f32 %v1780, %v749
  %v1787 = vsel %vm122, %v1322, 0
  %v1789 = vsel %vm122, %v1327, 0
  %v1792 = vsel %vm122, %v1783, 0
  %v1795 = vsel %vm122, %v1784, 0
  %v1798 = vsel %vm122, %v1785, 0
  %v1801 = vsel %vm122, %v1786, 0
  %1803 = vmatprep.subr.mxu0 0.0
  %1804 = vmatpush1.xpose.msra.mxu0 %v1792
  %1805 = vmatprep.subr.mxu0 0.0
  %1806 = vmatpush1.xpose.msra.mxu0 %v1795
  %1807 = vmatprep.subr.mxu0 0.0
  %1808 = vmatpush1.xpose.msra.mxu0 %v1798
  %1809 = vmatprep.subr.mxu0 0.0
  %1810 = vmatpush1.xpose.msra.mxu0 %v1801
  %1811 = vmatprep.subr.mxu0 0.0
  %1812 = vmatpush1.xpose.msra.mxu0 0.0
  %1813 = vmatprep.subr.mxu0 0.0
  %1814 = vmatpush1.xpose.msra.mxu0 0.0
  %1815 = vmatprep.subr.mxu0 0.0
  %1816 = vmatpush1.xpose.msra.mxu0 0.0
  %1817 = vmatprep.subr.mxu0 0.0
  %1818 = vmatpush1.xpose.msra.mxu0 0.0
  %1819 = vmatprep.subr.mxu0 0.0
  %1820 = vmatpush1.xpose.msra.mxu0 0.0
  %1821 = vmatprep.subr.mxu0 0.0
  %1822 = vmatpush1.xpose.msra.mxu0 0.0
  %1823 = vmatprep.subr.mxu0 0.0
  %1824 = vmatpush1.xpose.msra.mxu0 0.0
  %1825 = vmatprep.subr.mxu0 0.0
  %1826 = vmatpush1.xpose.msra.mxu0 0.0
  %1827 = vmatprep.subr.mxu0 0.0
  %1828 = vmatpush1.xpose.msra.mxu0 0.0
  %1829 = vmatprep.subr.mxu0 0.0
  %1830 = vmatpush1.xpose.msra.mxu0 0.0
  %1831 = vmatprep.subr.mxu0 0.0
  %1832 = vmatpush1.xpose.msra.mxu0 0.0
  %1833 = vmatprep.subr.mxu0 0.0
  %1834 = vmatpush1.xpose.msra.mxu0 0.0
  %1835 = vmatprep.subr.mxu0 0.0
  %1836 = vmatpush1.xpose.msra.mxu0 0.0
  %1837 = vmatprep.subr.mxu0 0.0
  %1838 = vmatpush1.xpose.msra.mxu0 0.0
  %1839 = vmatprep.subr.mxu0 0.0
  %1840 = vmatpush1.xpose.msra.mxu0 0.0
  %1841 = vmatprep.subr.mxu0 0.0
  %1842 = vmatpush1.xpose.msra.mxu0 0.0
  %1843 = vmatprep.subr.mxu0 0.0
  %1844 = vmatpush1.xpose.msra.mxu0 0.0
  %1845 = vmatprep.subr.mxu0 0.0
  %1846 = vmatpush1.xpose.msra.mxu0 0.0
  %1847 = vmatprep.subr.mxu0 0.0
  %1848 = vmatpush1.xpose.msra.mxu0 0.0
  %1849 = vmatprep.subr.mxu0 0.0
  %1850 = vmatpush1.xpose.msra.mxu0 0.0
  %1851 = vmatprep.subr.mxu0 0.0
  %1852 = vmatpush1.xpose.msra.mxu0 0.0
  %1853 = vmatprep.subr.mxu0 0.0
  %1854 = vmatpush1.xpose.msra.mxu0 0.0
  %1855 = vmatprep.subr.mxu0 0.0
  %1856 = vmatpush1.xpose.msra.mxu0 0.0
  %1857 = vmatprep.subr.mxu0 0.0
  %1858 = vmatpush1.xpose.msra.mxu0 0.0
  %1859 = vmatprep.subr.mxu0 0.0
  %1860 = vmatpush1.xpose.msra.mxu0 0.0
  %1861 = vmatprep.subr.mxu0 0.0
  %1862 = vmatpush1.xpose.msra.mxu0 0.0
  %1863 = vmatprep.subr.mxu0 0.0
  %1864 = vmatpush1.xpose.msra.mxu0 0.0
  %1865 = vmatprep.subr.mxu0 0.0
  %1866 = vmatpush1.xpose.msra.mxu0 0.0
  %1867 = vmatprep.mubr.f32.mxu0 0.0
  %1868 = vmatmul.mubr.f32.gmra.mrb[0].mxu0 %v1787
  %v1869 = vpop.f32.mrb[0].mxu0
  %v1870 = vadd.f32 %v754, %v1869
  %v1871 = vpop.f32.mrb[0].mxu0
  %1872 = vmatprep.mubr.f32.mxu0 0.0
  %1873 = vmatmul.mubr.f32.gmra.mrb[0].mxu0 %v1789
  %v1874 = vpop.f32.mrb[0].mxu0
  %v1875 = vadd.f32 %v755, %v1874
  %v1876 = vpop.f32.mrb[0].mxu0
  %1877 = vdwg.mxu0
  %v1878 = vsel %vm122, %v1870, -inf
  %1879 = vmax.xlane.f32.xlu0 %v1878
  %v1880 = vpop.xlane.xlu0 %1879
  %v1881 = vsel %vm122, %v1875, -inf
  %1882 = vmax.xlane.f32.xlu0 %v1881
  %v1883 = vpop.xlane.xlu0 %1882
  %v1884 = vsub.f32 %v1870, %v1880
  %v1885 = vsub.f32 %v1875, %v1883
  %v1886 = vmul.f32 %v1884, 1.442695
  %v1887 = vpow.pop %v1886
  %v1888 = vmul.f32 %v1885, 1.442695
  %v1889 = vpow.pop %v1888
  %v1891 = vsel %vm122, %v1887, 0
  %v1894 = vsel %vm122, %v1889, 0
  %1896 = vmatprep.subr.mxu0 0.0
  %1897 = vmatpush1.msra.mxu0 %v859
  %1898 = vmatprep.subr.mxu0 0.0
  %1899 = vmatpush1.msra.mxu0 %v860
  %1900 = vmatprep.subr.mxu0 0.0
  %1901 = vmatpush1.msra.mxu0 %v861
  %1902 = vmatprep.subr.mxu0 0.0
  %1903 = vmatpush1.msra.mxu0 %v862
  %1904 = vmatprep.subr.mxu0 0.0
  %1905 = vmatpush1.msra.mxu0 0.0
  %1906 = vmatprep.subr.mxu0 0.0
  %1907 = vmatpush1.msra.mxu0 0.0
  %1908 = vmatprep.subr.mxu0 0.0
  %1909 = vmatpush1.msra.mxu0 0.0
  %1910 = vmatprep.subr.mxu0 0.0
  %1911 = vmatpush1.msra.mxu0 0.0
  %1912 = vmatprep.subr.mxu0 0.0
  %1913 = vmatpush1.msra.mxu0 0.0
  %1914 = vmatprep.subr.mxu0 0.0
  %1915 = vmatpush1.msra.mxu0 0.0
  %1916 = vmatprep.subr.mxu0 0.0
  %1917 = vmatpush1.msra.mxu0 0.0
  %1918 = vmatprep.subr.mxu0 0.0
  %1919 = vmatpush1.msra.mxu0 0.0
  %1920 = vmatprep.subr.mxu0 0.0
  %1921 = vmatpush1.msra.mxu0 0.0
  %1922 = vmatprep.subr.mxu0 0.0
  %1923 = vmatpush1.msra.mxu0 0.0
  %1924 = vmatprep.subr.mxu0 0.0
  %1925 = vmatpush1.msra.mxu0 0.0
  %1926 = vmatprep.subr.mxu0 0.0
  %1927 = vmatpush1.msra.mxu0 0.0
  %1928 = vmatprep.subr.mxu0 0.0
  %1929 = vmatpush1.msra.mxu0 0.0
  %1930 = vmatprep.subr.mxu0 0.0
  %1931 = vmatpush1.msra.mxu0 0.0
  %1932 = vmatprep.subr.mxu0 0.0
  %1933 = vmatpush1.msra.mxu0 0.0
  %1934 = vmatprep.subr.mxu0 0.0
  %1935 = vmatpush1.msra.mxu0 0.0
  %1936 = vmatprep.subr.mxu0 0.0
  %1937 = vmatpush1.msra.mxu0 0.0
  %1938 = vmatprep.subr.mxu0 0.0
  %1939 = vmatpush1.msra.mxu0 0.0
  %1940 = vmatprep.subr.mxu0 0.0
  %1941 = vmatpush1.msra.mxu0 0.0
  %1942 = vmatprep.subr.mxu0 0.0
  %1943 = vmatpush1.msra.mxu0 0.0
  %1944 = vmatprep.subr.mxu0 0.0
  %1945 = vmatpush1.msra.mxu0 0.0
  %1946 = vmatprep.subr.mxu0 0.0
  %1947 = vmatpush1.msra.mxu0 0.0
  %1948 = vmatprep.subr.mxu0 0.0
  %1949 = vmatpush1.msra.mxu0 0.0
  %1950 = vmatprep.subr.mxu0 0.0
  %1951 = vmatpush1.msra.mxu0 0.0
  %1952 = vmatprep.subr.mxu0 0.0
  %1953 = vmatpush1.msra.mxu0 0.0
  %1954 = vmatprep.subr.mxu0 0.0
  %1955 = vmatpush1.msra.mxu0 0.0
  %1956 = vmatprep.subr.mxu0 0.0
  %1957 = vmatpush1.msra.mxu0 0.0
  %1958 = vmatprep.subr.mxu0 0.0
  %1959 = vmatpush1.msra.mxu0 0.0
  %1960 = vmatprep.mubr.f32.mxu0 0.0
  %1961 = vmatmul.mubr.f32.gmra.mrb[0].mxu0 %v1891
  %v1962 = vpop.f32.mrb[0].mxu0
  %v1963 = vadd.f32 0.0, %v1962
  %v1964 = vpop.f32.mrb[0].mxu0
  %1965 = vmatprep.mubr.f32.mxu0 0.0
  %1966 = vmatmul.mubr.f32.gmra.mrb[0].mxu0 %v1894
  %v1967 = vpop.f32.mrb[0].mxu0
  %v1968 = vadd.f32 0.0, %v1967
  %v1969 = vpop.f32.mrb[0].mxu0
  %1970 = vdwg.mxu0
  %v1971 = vrcp.pop %v1963
  %v1972 = vmul.f32 %v1887, %v1971
  %v1973 = vrcp.pop %v1968
  %v1974 = vmul.f32 %v1889, %v1973
  %v1975 = vld [vmem:[%s1 + $0x148] sm:$0xff]
  %v1976 = vld [vmem:[%s1 + $0x150] sm:$0xff]
  %v1977 = vld [vmem:[%s1 + $0x158] sm:$0xff]
  %v1978 = vld [vmem:[%s1 + $0x160] sm:$0xff]
  %v1979 = vmul.f32 %v1405, %v1975
  %v1980 = vmul.f32 %v1405, %v1976
  %v1981 = vmul.f32 %v1405, %v1977
  %v1982 = vmul.f32 %v1405, %v1978
  %v1984 = vsel %vm122, %v1972, 0
  %v1987 = vsel %vm122, %v1974, 0
  %1989 = vmatprep.subr.mxu0 0.0
  %1990 = vmatpush1.msra.mxu0 %v1979
  %1991 = vmatprep.subr.mxu0 0.0
  %1992 = vmatpush1.msra.mxu0 %v1980
  %1993 = vmatprep.subr.mxu0 0.0
  %1994 = vmatpush1.msra.mxu0 %v1981
  %1995 = vmatprep.subr.mxu0 0.0
  %1996 = vmatpush1.msra.mxu0 %v1982
  %1997 = vmatprep.subr.mxu0 0.0
  %1998 = vmatpush1.msra.mxu0 0.0
  %1999 = vmatprep.subr.mxu0 0.0
  %2000 = vmatpush1.msra.mxu0 0.0
  %2001 = vmatprep.subr.mxu0 0.0
  %2002 = vmatpush1.msra.mxu0 0.0
  %2003 = vmatprep.subr.mxu0 0.0
  %2004 = vmatpush1.msra.mxu0 0.0
  %2005 = vmatprep.subr.mxu0 0.0
  %2006 = vmatpush1.msra.mxu0 0.0
  %2007 = vmatprep.subr.mxu0 0.0
  %2008 = vmatpush1.msra.mxu0 0.0
  %2009 = vmatprep.subr.mxu0 0.0
  %2010 = vmatpush1.msra.mxu0 0.0
  %2011 = vmatprep.subr.mxu0 0.0
  %2012 = vmatpush1.msra.mxu0 0.0
  %2013 = vmatprep.subr.mxu0 0.0
  %2014 = vmatpush1.msra.mxu0 0.0
  %2015 = vmatprep.subr.mxu0 0.0
  %2016 = vmatpush1.msra.mxu0 0.0
  %2017 = vmatprep.subr.mxu0 0.0
  %2018 = vmatpush1.msra.mxu0 0.0
  %2019 = vmatprep.subr.mxu0 0.0
  %2020 = vmatpush1.msra.mxu0 0.0
  %2021 = vmatprep.subr.mxu0 0.0
  %2022 = vmatpush1.msra.mxu0 0.0
  %2023 = vmatprep.subr.mxu0 0.0
  %2024 = vmatpush1.msra.mxu0 0.0
  %2025 = vmatprep.subr.mxu0 0.0
  %2026 = vmatpush1.msra.mxu0 0.0
  %2027 = vmatprep.subr.mxu0 0.0
  %2028 = vmatpush1.msra.mxu0 0.0
  %2029 = vmatprep.subr.mxu0 0.0
  %2030 = vmatpush1.msra.mxu0 0.0
  %2031 = vmatprep.subr.mxu0 0.0
  %2032 = vmatpush1.msra.mxu0 0.0
  %2033 = vmatprep.subr.mxu0 0.0
  %2034 = vmatpush1.msra.mxu0 0.0
  %2035 = vmatprep.subr.mxu0 0.0
  %2036 = vmatpush1.msra.mxu0 0.0
  %2037 = vmatprep.subr.mxu0 0.0
  %2038 = vmatpush1.msra.mxu0 0.0
  %2039 = vmatprep.subr.mxu0 0.0
  %2040 = vmatpush1.msra.mxu0 0.0
  %2041 = vmatprep.subr.mxu0 0.0
  %2042 = vmatpush1.msra.mxu0 0.0
  %2043 = vmatprep.subr.mxu0 0.0
  %2044 = vmatpush1.msra.mxu0 0.0
  %2045 = vmatprep.subr.mxu0 0.0
  %2046 = vmatpush1.msra.mxu0 0.0
  %2047 = vmatprep.subr.mxu0 0.0
  %2048 = vmatpush1.msra.mxu0 0.0
  %2049 = vmatprep.subr.mxu0 0.0
  %2050 = vmatpush1.msra.mxu0 0.0
  %2051 = vmatprep.subr.mxu0 0.0
  %2052 = vmatpush1.msra.mxu0 0.0
  %2053 = vmatprep.mubr.f32.mxu0 0.0
  %2054 = vmatmul.mubr.f32.gmra.mrb[0].mxu0 %v1984
  %v2055 = vpop.f32.mrb[0].mxu0
  %v2056 = vadd.f32 0.0, %v2055
  %v2057 = vpop.f32.mrb[0].mxu0
  %2058 = vmatprep.mubr.f32.mxu0 0.0
  %2059 = vmatmul.mubr.f32.gmra.mrb[0].mxu0 %v1987
  %v2060 = vpop.f32.mrb[0].mxu0
  %v2061 = vadd.f32 0.0, %v2060
  %v2062 = vpop.f32.mrb[0].mxu0
  %2063 = vdwg.mxu0
  %v2064 = vadd.f32 %v1243, %v2056
  %v2065 = vadd.f32 %v1244, %v2061
  %v2066 = vld [vmem:[%s2 + $0x60] sm:$0xff]
  %v2067 = vld [vmem:[%s2 + $0x68] sm:$0xff]
  %v2068 = vld [vmem:[%s2 + $0x70] sm:$0xff]
  %v2069 = vld [vmem:[%s2 + $0x78] sm:$0xff]
  %v2070 = vld [vmem:[%s2 + $0x88] sm:$0x1]
  %v2071 = vlaneseq
  %v2072 = vshrl.u32 %v2071, 7
  %v2073 = vsub.s32 0, %v2072
  %v2074 = vrot.slane %v2070, %v2073
  %v2076 = vsel %vm122, %v2064, 0
  %v2079 = vsel %vm122, %v2065, 0
  %2081 = vmatprep.subr.mxu0 0.0
  %2082 = vmatpush1.msra.mxu0 %v2066
  %2083 = vmatprep.subr.mxu0 0.0
  %2084 = vmatpush1.msra.mxu0 %v2067
  %2085 = vmatprep.subr.mxu0 0.0
  %2086 = vmatpush1.msra.mxu0 %v2068
  %2087 = vmatprep.subr.mxu0 0.0
  %2088 = vmatpush1.msra.mxu0 %v2069
  %2089 = vmatprep.subr.mxu0 0.0
  %2090 = vmatpush1.msra.mxu0 0.0
  %2091 = vmatprep.subr.mxu0 0.0
  %2092 = vmatpush1.msra.mxu0 0.0
  %2093 = vmatprep.subr.mxu0 0.0
  %2094 = vmatpush1.msra.mxu0 0.0
  %2095 = vmatprep.subr.mxu0 0.0
  %2096 = vmatpush1.msra.mxu0 0.0
  %2097 = vmatprep.subr.mxu0 0.0
  %2098 = vmatpush1.msra.mxu0 0.0
  %2099 = vmatprep.subr.mxu0 0.0
  %2100 = vmatpush1.msra.mxu0 0.0
  %2101 = vmatprep.subr.mxu0 0.0
  %2102 = vmatpush1.msra.mxu0 0.0
  %2103 = vmatprep.subr.mxu0 0.0
  %2104 = vmatpush1.msra.mxu0 0.0
  %2105 = vmatprep.subr.mxu0 0.0
  %2106 = vmatpush1.msra.mxu0 0.0
  %2107 = vmatprep.subr.mxu0 0.0
  %2108 = vmatpush1.msra.mxu0 0.0
  %2109 = vmatprep.subr.mxu0 0.0
  %2110 = vmatpush1.msra.mxu0 0.0
  %2111 = vmatprep.subr.mxu0 0.0
  %2112 = vmatpush1.msra.mxu0 0.0
  %2113 = vmatprep.subr.mxu0 0.0
  %2114 = vmatpush1.msra.mxu0 0.0
  %2115 = vmatprep.subr.mxu0 0.0
  %2116 = vmatpush1.msra.mxu0 0.0
  %2117 = vmatprep.subr.mxu0 0.0
  %2118 = vmatpush1.msra.mxu0 0.0
  %2119 = vmatprep.subr.mxu0 0.0
  %2120 = vmatpush1.msra.mxu0 0.0
  %2121 = vmatprep.subr.mxu0 0.0
  %2122 = vmatpush1.msra.mxu0 0.0
  %2123 = vmatprep.subr.mxu0 0.0
  %2124 = vmatpush1.msra.mxu0 0.0
  %2125 = vmatprep.subr.mxu0 0.0
  %2126 = vmatpush1.msra.mxu0 0.0
  %2127 = vmatprep.subr.mxu0 0.0
  %2128 = vmatpush1.msra.mxu0 0.0
  %2129 = vmatprep.subr.mxu0 0.0
  %2130 = vmatpush1.msra.mxu0 0.0
  %2131 = vmatprep.subr.mxu0 0.0
  %2132 = vmatpush1.msra.mxu0 0.0
  %2133 = vmatprep.subr.mxu0 0.0
  %2134 = vmatpush1.msra.mxu0 0.0
  %2135 = vmatprep.subr.mxu0 0.0
  %2136 = vmatpush1.msra.mxu0 0.0
  %2137 = vmatprep.subr.mxu0 0.0
  %2138 = vmatpush1.msra.mxu0 0.0
  %2139 = vmatprep.subr.mxu0 0.0
  %2140 = vmatpush1.msra.mxu0 0.0
  %2141 = vmatprep.subr.mxu0 0.0
  %2142 = vmatpush1.msra.mxu0 0.0
  %2143 = vmatprep.subr.mxu0 0.0
  %2144 = vmatpush1.msra.mxu0 0.0
  %2145 = vmatprep.mubr.f32.mxu0 0.0
  %2146 = vmatmul.mubr.f32.gmra.mrb[0].mxu0 %v2076
  %v2147 = vpop.f32.mrb[0].mxu0
  %v2148 = vadd.f32 %v2074, %v2147
  %v2149 = vpop.f32.mrb[0].mxu0
  %2150 = vmatprep.mubr.f32.mxu0 0.0
  %2151 = vmatmul.mubr.f32.gmra.mrb[0].mxu0 %v2079
  %v2152 = vpop.f32.mrb[0].mxu0
  %v2153 = vadd.f32 %v2074, %v2152
  %v2154 = vpop.f32.mrb[0].mxu0
  %2155 = vdwg.mxu0
  %v2156 = vmul.f32 %v2148, 0.5
  %v2157 = vmul.f32 %v2153, 0.5
  %v2158 = vmul.f32 %v2148, 0.70710677
  %v2159 = vmul.f32 %v2153, 0.70710677
  %v2160 = verf.f32.pop %v2158
  %v2161 = verf.f32.pop %v2159
  %v2162 = vadd.f32 %v2160, 1.0
  %v2163 = vadd.f32 %v2161, 1.0
  %v2164 = vmul.f32 %v2156, %v2162
  %v2165 = vmul.f32 %v2157, %v2163
  %2166 = vrot.lane.b32.xlu0 %v2148, 64
  %v2167 = vpop.permute.xlu0 %2166
  %2168 = vrot.lane.b32.xlu0 %v2153, 64
  %v2169 = vpop.permute.xlu0 %2168
  %v2170 = vmul.f32 %v2164, %v2167
  %v2171 = vmul.f32 %v2165, %v2169
  %v2172 = vld [vmem:[%s1 + $0x1e8] sm:$0xff]
  %v2173 = vld [vmem:[%s1 + $0x1f0] sm:$0xff]
  %v2174 = vld [vmem:[%s1 + $0x1f8] sm:$0xff]
  %v2175 = vld [vmem:[%s1 + $0x200] sm:$0xff]
  %v2176 = vld [vmem:[%s1 + $0x208] sm:$0xff]
  %v2177 = vld [vmem:[%s1 + $0x210] sm:$0xff]
  %v2178 = vld [vmem:[%s1 + $0x218] sm:$0xff]
  %v2179 = vld [vmem:[%s1 + $0x220] sm:$0xff]
  %v2180 = vld [vmem:[%s1 + $0x228] sm:$0xff]
  %v2181 = vld [vmem:[%s1 + $0x230] sm:$0xff]
  %v2182 = vld [vmem:[%s1 + $0x238] sm:$0xff]
  %v2183 = vld [vmem:[%s1 + $0x240] sm:$0xff]
  %v2184 = vld [vmem:[%s1 + $0x248] sm:$0xff]
  %v2185 = vld [vmem:[%s1 + $0x250] sm:$0xff]
  %v2186 = vld [vmem:[%s1 + $0x258] sm:$0xff]
  %v2187 = vld [vmem:[%s1 + $0x260] sm:$0xff]
  %2188 = vmatprep.subr.mxu0 0.0
  %2189 = vmatpush1.msra.mxu0 %v2172
  %2190 = vmatprep.subr.mxu0 0.0
  %2191 = vmatpush1.msra.mxu0 %v2173
  %2192 = vmatprep.subr.mxu0 0.0
  %2193 = vmatpush1.msra.mxu0 %v2174
  %2194 = vmatprep.subr.mxu0 0.0
  %2195 = vmatpush1.msra.mxu0 %v2175
  %2196 = vmatprep.subr.mxu0 0.0
  %2197 = vmatpush1.msra.mxu0 %v2176
  %2198 = vmatprep.subr.mxu0 0.0
  %2199 = vmatpush1.msra.mxu0 %v2177
  %2200 = vmatprep.subr.mxu0 0.0
  %2201 = vmatpush1.msra.mxu0 %v2178
  %2202 = vmatprep.subr.mxu0 0.0
  %2203 = vmatpush1.msra.mxu0 %v2179
  %2204 = vmatprep.subr.mxu0 0.0
  %2205 = vmatpush1.msra.mxu0 %v2180
  %2206 = vmatprep.subr.mxu0 0.0
  %2207 = vmatpush1.msra.mxu0 %v2181
  %2208 = vmatprep.subr.mxu0 0.0
  %2209 = vmatpush1.msra.mxu0 %v2182
  %2210 = vmatprep.subr.mxu0 0.0
  %2211 = vmatpush1.msra.mxu0 %v2183
  %2212 = vmatprep.subr.mxu0 0.0
  %2213 = vmatpush1.msra.mxu0 %v2184
  %2214 = vmatprep.subr.mxu0 0.0
  %2215 = vmatpush1.msra.mxu0 %v2185
  %2216 = vmatprep.subr.mxu0 0.0
  %2217 = vmatpush1.msra.mxu0 %v2186
  %2218 = vmatprep.subr.mxu0 0.0
  %2219 = vmatpush1.msra.mxu0 %v2187
  %2220 = vmatprep.subr.mxu0 0.0
  %2221 = vmatpush1.msra.mxu0 0.0
  %2222 = vmatprep.subr.mxu0 0.0
  %2223 = vmatpush1.msra.mxu0 0.0
  %2224 = vmatprep.subr.mxu0 0.0
  %2225 = vmatpush1.msra.mxu0 0.0
  %2226 = vmatprep.subr.mxu0 0.0
  %2227 = vmatpush1.msra.mxu0 0.0
  %2228 = vmatprep.subr.mxu0 0.0
  %2229 = vmatpush1.msra.mxu0 0.0
  %2230 = vmatprep.subr.mxu0 0.0
  %2231 = vmatpush1.msra.mxu0 0.0
  %2232 = vmatprep.subr.mxu0 0.0
  %2233 = vmatpush1.msra.mxu0 0.0
  %2234 = vmatprep.subr.mxu0 0.0
  %2235 = vmatpush1.msra.mxu0 0.0
  %2236 = vmatprep.subr.mxu0 0.0
  %2237 = vmatpush1.msra.mxu0 0.0
  %2238 = vmatprep.subr.mxu0 0.0
  %2239 = vmatpush1.msra.mxu0 0.0
  %2240 = vmatprep.subr.mxu0 0.0
  %2241 = vmatpush1.msra.mxu0 0.0
  %2242 = vmatprep.subr.mxu0 0.0
  %2243 = vmatpush1.msra.mxu0 0.0
  %2244 = vmatprep.subr.mxu0 0.0
  %2245 = vmatpush1.msra.mxu0 0.0
  %2246 = vmatprep.subr.mxu0 0.0
  %2247 = vmatpush1.msra.mxu0 0.0
  %2248 = vmatprep.subr.mxu0 0.0
  %2249 = vmatpush1.msra.mxu0 0.0
  %2250 = vmatprep.subr.mxu0 0.0
  %2251 = vmatpush1.msra.mxu0 0.0
  %2252 = vmatprep.mubr.f32.mxu0 0.0
  %2253 = vmatmul.mubr.f32.gmra.mrb[0].mxu0 %v2170
  %v2254 = vpop.f32.mrb[0].mxu0
  %v2255 = vadd.f32 0.0, %v2254
  %v2256 = vpop.f32.mrb[0].mxu0
  %2257 = vmatprep.mubr.f32.mxu0 0.0
  %2258 = vmatmul.mubr.f32.gmra.mrb[0].mxu0 %v2171
  %v2259 = vpop.f32.mrb[0].mxu0
  %v2260 = vadd.f32 0.0, %v2259
  %v2261 = vpop.f32.mrb[0].mxu0
  %2262 = vdwg.mxu0
  %v2263 = vadd.f32 %v2064, %v2255
  %v2264 = vadd.f32 %v2065, %v2260
  %v2265 = vld [vmem:[%s1 + $0x270] sm:$0x1]
  %v2266 = vlaneseq
  %v2267 = vshrl.u32 %v2266, 7
  %v2268 = vsub.s32 0, %v2267
  %v2269 = vrot.slane %v2265, %v2268
  %v2270 = vadd.f32 %v2263, %v2269
  %v2271 = vadd.f32 %v2264, %v2269
  %v2272 = vld [vmem:[%s2 + $0x90] sm:$0xff]
  %v2273 = vld [vmem:[%s2 + $0x98] sm:$0xff]
  %v2274 = vld [vmem:[%s2 + $0xa0] sm:$0xff]
  %v2275 = vld [vmem:[%s2 + $0xa8] sm:$0xff]
  %v2276 = vld [vmem:[%s2 + $0xb0] sm:$0x1]
  %v2277 = vlaneseq
  %v2278 = vshrl.u32 %v2277, 7
  %v2279 = vsub.s32 0, %v2278
  %v2280 = vrot.slane %v2276, %v2279
  %v2282 = vsel %vm122, %v2270, 0
  %v2285 = vsel %vm122, %v2271, 0
  %2287 = vmatprep.subr.mxu0 0.0
  %2288 = vmatpush1.msra.mxu0 %v2272
  %2289 = vmatprep.subr.mxu0 0.0
  %2290 = vmatpush1.msra.mxu0 %v2273
  %2291 = vmatprep.subr.mxu0 0.0
  %2292 = vmatpush1.msra.mxu0 %v2274
  %2293 = vmatprep.subr.mxu0 0.0
  %2294 = vmatpush1.msra.mxu0 %v2275
  %2295 = vmatprep.subr.mxu0 0.0
  %2296 = vmatpush1.msra.mxu0 0.0
  %2297 = vmatprep.subr.mxu0 0.0
  %2298 = vmatpush1.msra.mxu0 0.0
  %2299 = vmatprep.subr.mxu0 0.0
  %2300 = vmatpush1.msra.mxu0 0.0
  %2301 = vmatprep.subr.mxu0 0.0
  %2302 = vmatpush1.msra.mxu0 0.0
  %2303 = vmatprep.subr.mxu0 0.0
  %2304 = vmatpush1.msra.mxu0 0.0
  %2305 = vmatprep.subr.mxu0 0.0
  %2306 = vmatpush1.msra.mxu0 0.0
  %2307 = vmatprep.subr.mxu0 0.0
  %2308 = vmatpush1.msra.mxu0 0.0
  %2309 = vmatprep.subr.mxu0 0.0
  %2310 = vmatpush1.msra.mxu0 0.0
  %2311 = vmatprep.subr.mxu0 0.0
  %2312 = vmatpush1.msra.mxu0 0.0
  %2313 = vmatprep.subr.mxu0 0.0
  %2314 = vmatpush1.msra.mxu0 0.0
  %2315 = vmatprep.subr.mxu0 0.0
  %2316 = vmatpush1.msra.mxu0 0.0
  %2317 = vmatprep.subr.mxu0 0.0
  %2318 = vmatpush1.msra.mxu0 0.0
  %2319 = vmatprep.subr.mxu0 0.0
  %2320 = vmatpush1.msra.mxu0 0.0
  %2321 = vmatprep.subr.mxu0 0.0
  %2322 = vmatpush1.msra.mxu0 0.0
  %2323 = vmatprep.subr.mxu0 0.0
  %2324 = vmatpush1.msra.mxu0 0.0
  %2325 = vmatprep.subr.mxu0 0.0
  %2326 = vmatpush1.msra.mxu0 0.0
  %2327 = vmatprep.subr.mxu0 0.0
  %2328 = vmatpush1.msra.mxu0 0.0
  %2329 = vmatprep.subr.mxu0 0.0
  %2330 = vmatpush1.msra.mxu0 0.0
  %2331 = vmatprep.subr.mxu0 0.0
  %2332 = vmatpush1.msra.mxu0 0.0
  %2333 = vmatprep.subr.mxu0 0.0
  %2334 = vmatpush1.msra.mxu0 0.0
  %2335 = vmatprep.subr.mxu0 0.0
  %2336 = vmatpush1.msra.mxu0 0.0
  %2337 = vmatprep.subr.mxu0 0.0
  %2338 = vmatpush1.msra.mxu0 0.0
  %2339 = vmatprep.subr.mxu0 0.0
  %2340 = vmatpush1.msra.mxu0 0.0
  %2341 = vmatprep.subr.mxu0 0.0
  %2342 = vmatpush1.msra.mxu0 0.0
  %2343 = vmatprep.subr.mxu0 0.0
  %2344 = vmatpush1.msra.mxu0 0.0
  %2345 = vmatprep.subr.mxu0 0.0
  %2346 = vmatpush1.msra.mxu0 0.0
  %2347 = vmatprep.subr.mxu0 0.0
  %2348 = vmatpush1.msra.mxu0 0.0
  %2349 = vmatprep.subr.mxu0 0.0
  %2350 = vmatpush1.msra.mxu0 0.0
  %2351 = vmatprep.mubr.f32.mxu0 0.0
  %2352 = vmatmul.mubr.f32.gmra.mrb[0].mxu0 %v2282
  %v2353 = vpop.f32.mrb[0].mxu0
  %v2354 = vadd.f32 %v2280, %v2353
  %v2355 = vpop.f32.mrb[0].mxu0
  %2356 = vmatprep.mubr.f32.mxu0 0.0
  %2357 = vmatmul.mubr.f32.gmra.mrb[0].mxu0 %v2285
  %v2358 = vpop.f32.mrb[0].mxu0
  %v2359 = vadd.f32 %v2280, %v2358
  %v2360 = vpop.f32.mrb[0].mxu0
  %2361 = vdwg.mxu0
  %2362 = vst [vmem:[%s3] sm:$0xff] %v2354
  %2363 = vst [vmem:[%s3 + $0x8] sm:$0xff] %v2359
  // Predicated region
  $region14: #{bonz_lm_forward.1} parent=0 // pred_check
    _
  $region15: #{bonz_lm_forward.1} parent=0 // pred_check_branch
    %2365 = sbr.rel (0) target = $region17
  $region16: #{bonz_lm_forward.1} parent=0 // pred_region
    _
  $region17: #{bonz_lm_forward.1} parent=0 // pred_fallthru
    _
  // Predicated region
  $region18: #{bonz_lm_forward.1} parent=0 // pred_check
    _
  $region19: #{bonz_lm_forward.1} parent=0 // pred_check_branch
    %2367 = sbr.rel (0) target = $region21
  $region20: #{bonz_lm_forward.1} parent=0 // pred_region
    _
  $region21: #{bonz_lm_forward.1} parent=0 // pred_fallthru
    _

</llo_original>
